<compile_context>
chip_gen: v6e
topology: v6e:2x2x1
jax: 0.10.0
libtpu: 0.0.40
codegen_flags: <defaults>
</compile_context>

<pallas_src>
import functools

import jax
import jax.numpy as jnp
from jax.experimental import pallas as pl
from jax.experimental.pallas import tpu as pltpu

IN_DIM = 32 * 32 * 1      # 1024
HID_DIM = 100             # logical hidden width (PyTorch)
OUT_DIM = 10              # logical output width (PyTorch)
HID_PAD = 128             # lane-padded hidden width
OUT_PAD = 128             # lane-padded output width
BATCH = 256               # matches the original spec: torch.randn(256, 1024)


@functools.lru_cache(maxsize=1)
def _tensorcores_per_chip() -> int:
    """v7x has 2 TensorCores per chip; v5e / v6e have 1. Safe fallback: 1."""
    try:
        kind = jax.devices()[0].device_kind.lower()
    except Exception:
        return 1
    return 2 if ("v7" in kind or "7x" in kind) else 1


def _batch_tile(batch: int) -> int:
    # v7x: split the batch across the two TensorCores (grid=(2,), "parallel").
    # v5e/v6e: single grid step is strictly cheaper (~0.35 us/step overhead,
    # nothing meaningful to overlap; working set << scoped VMEM everywhere).
    if _tensorcores_per_chip() == 2 and batch % 2 == 0 and (batch // 2) % 16 == 0:
        return batch // 2
    return batch


def mlp_kernel(x_ref, w1_ref, b1_ref, w2_ref, b2_ref, o_ref):
    # fc1: cast the f32 x tile to bf16 in VMEM (no extra HBM pass / XLA launch),
    # MXU matmul accumulates in f32.
    h = jnp.dot(x_ref[...].astype(jnp.bfloat16), w1_ref[...],
                preferred_element_type=jnp.float32)
    # bias + ReLU on the f32 accumulator (VPU).
    h = jnp.maximum(h + b1_ref[...], 0.0)
    # fc2: [TB, 128](bf16) @ [128, 128](bf16) -> f32 accumulator.
    out = jnp.dot(h.astype(jnp.bfloat16), w2_ref[...],
                  preferred_element_type=jnp.float32)
    # bf16 lane-dense store; wrapper slices [:, :10] and upcasts.
    o_ref[...] = (out + b2_ref[...]).astype(o_ref.dtype)


def pack_params(w1, b1, w2, b2):
    """One-time packing (run once, outside the per-call forward):
    zero-pad to lane-dense widths and cast matmul weights to bf16."""
    w1p = jnp.zeros((IN_DIM, HID_PAD), jnp.float32).at[:, :HID_DIM].set(w1)
    b1p = jnp.zeros((1, HID_PAD), jnp.float32).at[:, :HID_DIM].set(b1)
    w2p = jnp.zeros((HID_PAD, OUT_PAD), jnp.float32).at[:HID_DIM, :OUT_DIM].set(w2)
    b2p = jnp.zeros((1, OUT_PAD), jnp.float32).at[:, :OUT_DIM].set(b2)
    return (w1p.astype(jnp.bfloat16), b1p, w2p.astype(jnp.bfloat16), b2p)


@jax.jit
def mlp_forward(x, packed):
    """x: [B, 1024] f32; packed = pack_params(w1, b1, w2, b2). Returns [B, 10] f32."""
    w1_bf, b1p, w2_bf, b2p = packed
    B = x.shape[0]
    tb = _batch_tile(B)
    assert B % tb == 0 and tb % 8 == 0, "batch must tile into sublane-aligned blocks"

    flops = 2 * B * IN_DIM * HID_PAD + 2 * B * HID_PAD * OUT_PAD
    bytes_accessed = (x.size * 4                      # x read as f32
                      + w1_bf.size * 2 + w2_bf.size * 2
                      + b1p.size * 4 + b2p.size * 4
                      + B * OUT_PAD * 2)              # bf16 output writeback

    out_padded = pl.pallas_call(
        mlp_kernel,
        out_shape=jax.ShapeDtypeStruct((B, OUT_PAD), jnp.bfloat16),
        grid=(B // tb,),
        in_specs=[
            pl.BlockSpec((tb, IN_DIM), lambda i: (i, 0)),        # x tile (pipelined)
            pl.BlockSpec((IN_DIM, HID_PAD), lambda i: (0, 0)),   # w1 (VMEM-resident)
            pl.BlockSpec((1, HID_PAD), lambda i: (0, 0)),        # b1
            pl.BlockSpec((HID_PAD, OUT_PAD), lambda i: (0, 0)),  # w2
            pl.BlockSpec((1, OUT_PAD), lambda i: (0, 0)),        # b2
        ],
        out_specs=pl.BlockSpec((tb, OUT_PAD), lambda i: (i, 0)),
        compiler_params=pltpu.CompilerParams(
            dimension_semantics=("parallel",)),
        cost_estimate=pl.CostEstimate(
            flops=flops, transcendentals=0, bytes_accessed=bytes_accessed),
    )(x, w1_bf, b1p, w2_bf, b2p)

    # Drop the lane padding; upcast the tiny real output back to f32.
    return out_padded[:, :OUT_DIM].astype(jnp.float32)


def init_params(key):
    # Deterministic init mirroring torch.nn.Linear's U(-1/sqrt(fan_in), +1/sqrt(fan_in)).
    k1, k2, k3, k4 = jax.random.split(key, 4)
    lim1 = 1.0 / jnp.sqrt(IN_DIM)
    lim2 = 1.0 / jnp.sqrt(HID_DIM)
    w1 = jax.random.uniform(k1, (IN_DIM, HID_DIM), jnp.float32, -lim1, lim1)
    b1 = jax.random.uniform(k2, (HID_DIM,), jnp.float32, -lim1, lim1)
    w2 = jax.random.uniform(k3, (HID_DIM, OUT_DIM), jnp.float32, -lim2, lim2)
    b2 = jax.random.uniform(k4, (OUT_DIM,), jnp.float32, -lim2, lim2)
    return w1, b1, w2, b2


if __name__ == "__main__":
    key = jax.random.PRNGKey(0)
    kx, kp = jax.random.split(key)
    x1 = jax.random.normal(kx, (BATCH, IN_DIM), jnp.float32)
    w1, b1, w2, b2 = init_params(kp)

    packed = pack_params(w1, b1, w2, b2)       # one-time pack (not per call)
    out = mlp_forward(x1, packed)
    out = jax.block_until_ready(out)
    assert out.shape == (BATCH, OUT_DIM)

    # Reference mirroring the kernel's mixed precision exactly
    # (bf16 MXU operands, f32 accumulation/epilogue, bf16 output store).
    h_ref = jnp.dot(x1.astype(jnp.bfloat16), w1.astype(jnp.bfloat16),
                    preferred_element_type=jnp.float32) + b1[None, :]
    h_ref = jnp.maximum(h_ref, 0.0)
    ref = jnp.dot(h_ref.astype(jnp.bfloat16), w2.astype(jnp.bfloat16),
                  preferred_element_type=jnp.float32) + b2[None, :]
    ref = ref.astype(jnp.bfloat16).astype(jnp.float32)
    assert jnp.allclose(out, ref, atol=1e-2, rtol=1e-2)

    # Sanity check vs. the full-precision PyTorch-equivalent forward.
    ref_f32 = jnp.maximum(x1 @ w1 + b1[None, :], 0.0) @ w2 + b2[None, :]
    assert jnp.allclose(out, ref_f32, atol=1.5e-1, rtol=1.5e-1)

    print("KERNEL_OK")
</pallas_src>

<mosaic_0001>
module attributes {stable_mosaic.version = 11 : i64} {
  func.func @mlp_kernel(%arg0: i32, %arg1: memref<256x1024xf32, #tpu.memory_space<vmem>>, %arg2: memref<1024x128xbf16, #tpu.memory_space<vmem>>, %arg3: memref<1x128xf32, #tpu.memory_space<vmem>>, %arg4: memref<128x128xbf16, #tpu.memory_space<vmem>>, %arg5: memref<1x128xf32, #tpu.memory_space<vmem>>, %arg6: memref<256x128xbf16, #tpu.memory_space<vmem>>) attributes {dimension_semantics = [#tpu.dimension_semantics<parallel>], iteration_bounds = array<i64: 1>, scalar_prefetch = 0 : i64, scratch_operands = 0 : i64, tpu.core_type = #tpu.core_type<tc>, window_params = [{transform_indices = @transform_0, window_bounds = array<i64: 256, 1024>}, {pipeline_mode = #tpu.pipeline_mode<synchronous>, transform_indices = @transform_1, window_bounds = array<i64: 1024, 128>}, {pipeline_mode = #tpu.pipeline_mode<synchronous>, transform_indices = @transform_2, window_bounds = array<i64: 1, 128>}, {pipeline_mode = #tpu.pipeline_mode<synchronous>, transform_indices = @transform_3, window_bounds = array<i64: 128, 128>}, {pipeline_mode = #tpu.pipeline_mode<synchronous>, transform_indices = @transform_4, window_bounds = array<i64: 1, 128>}, {transform_indices = @transform_5, window_bounds = array<i64: 256, 128>}]} {
    %c0 = arith.constant 0 : index
    %c0_0 = arith.constant 0 : index
    %0 = vector.load %arg1[%c0, %c0_0] : memref<256x1024xf32, #tpu.memory_space<vmem>>, vector<256x1024xf32>
    %1 = arith.truncf %0 : vector<256x1024xf32> to vector<256x1024xbf16>
    %c0_1 = arith.constant 0 : index
    %c0_2 = arith.constant 0 : index
    %2 = vector.load %arg2[%c0_1, %c0_2] : memref<1024x128xbf16, #tpu.memory_space<vmem>>, vector<1024x128xbf16>
    %cst = arith.constant dense<0.000000e+00> : vector<256x128xf32>
    %3 = tpu.matmul %1, %2, %cst {dimension_numbers = #tpu.dot_dimension_numbers<[1], [0], [0], [1], [0, 0, 1, 1], [], []>} : vector<256x1024xbf16>, vector<1024x128xbf16>, vector<256x128xf32> -> vector<256x128xf32>
    %c0_3 = arith.constant 0 : index
    %c0_4 = arith.constant 0 : index
    %4 = vector.load %arg3[%c0_3, %c0_4] : memref<1x128xf32, #tpu.memory_space<vmem>>, vector<1x128xf32>
    %5 = vector.broadcast %4 : vector<1x128xf32> to vector<256x128xf32>
    %6 = arith.addf %3, %5 : vector<256x128xf32>
    %cst_5 = arith.constant 0.000000e+00 : f32
    %7 = vector.broadcast %cst_5 : f32 to vector<256x128xf32>
    %8 = arith.maximumf %6, %7 : vector<256x128xf32>
    %9 = arith.truncf %8 : vector<256x128xf32> to vector<256x128xbf16>
    %c0_6 = arith.constant 0 : index
    %c0_7 = arith.constant 0 : index
    %10 = vector.load %arg4[%c0_6, %c0_7] : memref<128x128xbf16, #tpu.memory_space<vmem>>, vector<128x128xbf16>
    %cst_8 = arith.constant dense<0.000000e+00> : vector<256x128xf32>
    %11 = tpu.matmul %9, %10, %cst_8 {dimension_numbers = #tpu.dot_dimension_numbers<[1], [0], [0], [1], [0, 0, 1, 1], [], []>} : vector<256x128xbf16>, vector<128x128xbf16>, vector<256x128xf32> -> vector<256x128xf32>
    %c0_9 = arith.constant 0 : index
    %c0_10 = arith.constant 0 : index
    %12 = vector.load %arg5[%c0_9, %c0_10] : memref<1x128xf32, #tpu.memory_space<vmem>>, vector<1x128xf32>
    %13 = vector.broadcast %12 : vector<1x128xf32> to vector<256x128xf32>
    %14 = arith.addf %11, %13 : vector<256x128xf32>
    %15 = arith.truncf %14 : vector<256x128xf32> to vector<256x128xbf16>
    %c0_11 = arith.constant 0 : index
    %c0_12 = arith.constant 0 : index
    %16 = vector.load %arg6[%c0_11, %c0_12] : memref<256x128xbf16, #tpu.memory_space<vmem>>, vector<256x128xbf16>
    tpu.vector_store %arg6[%c0_11, %c0_12], %15 {strides = array<i32>} : memref<256x128xbf16, #tpu.memory_space<vmem>>, vector<256x128xbf16>,
    return
  }
  func.func @transform_0(%arg0: i32) -> (i32, i32) {
    %c0_i32 = arith.constant 0 : i32
    %c0_i32_0 = arith.constant 0 : i32
    return %arg0, %c0_i32 : i32, i32
  }
  func.func @transform_1(%arg0: i32) -> (i32, i32) {
    %c0_i32 = arith.constant 0 : i32
    %c0_i32_0 = arith.constant 0 : i32
    %c0_i32_1 = arith.constant 0 : i32
    return %c0_i32, %c0_i32_0 : i32, i32
  }
  func.func @transform_2(%arg0: i32) -> (i32, i32) {
    %c0_i32 = arith.constant 0 : i32
    %c0_i32_0 = arith.constant 0 : i32
    %c0_i32_1 = arith.constant 0 : i32
    return %c0_i32, %c0_i32_0 : i32, i32
  }
  func.func @transform_3(%arg0: i32) -> (i32, i32) {
    %c0_i32 = arith.constant 0 : i32
    %c0_i32_0 = arith.constant 0 : i32
    %c0_i32_1 = arith.constant 0 : i32
    return %c0_i32, %c0_i32_0 : i32, i32
  }
  func.func @transform_4(%arg0: i32) -> (i32, i32) {
    %c0_i32 = arith.constant 0 : i32
    %c0_i32_0 = arith.constant 0 : i32
    %c0_i32_1 = arith.constant 0 : i32
    return %c0_i32, %c0_i32_0 : i32, i32
  }
  func.func @transform_5(%arg0: i32) -> (i32, i32) {
    %c0_i32 = arith.constant 0 : i32
    %c0_i32_0 = arith.constant 0 : i32
    return %arg0, %c0_i32 : i32, i32
  }
}

</mosaic_0001>

<llo_original>
// kernel: mlp_forward.1
$region0: #{mlp_forward.1}
  #allocation0 [shape = 'u32[]', space=smem, size = 0x4, offset = 0x4, fixed_abs, tag = 'smem constant byte address 0x4 - core index']
  #allocation1 [shape = 'u32[144,128]{1,0:T(1,128)}', space=vmem, size = 0x12000, scoped, tag = 'internal scratch']
  %s0 = inlined_call_operand.hbm [shape: f32[256,1024], index: 0, kind: input, shape index: {}]
  %s1 = inlined_call_operand.hbm [shape: bf16[1024,128], index: 1, kind: input, shape index: {}]
  %s2 = inlined_call_operand.vmem [shape: f32[1,128], index: 2, kind: input, shape index: {}]
  %s3 = inlined_call_operand.hbm [shape: bf16[128,128], index: 3, kind: input, shape index: {}]
  %s4 = inlined_call_operand.vmem [shape: f32[1,128], index: 4, kind: input, shape index: {}]
  %s5 = inlined_call_operand.vmem [shape: bf16[256,128], index: 5, kind: output, shape index: {}]
  %s6 = sld [smem:[#allocation0]]
  $region42: #{mlp_forward.1} parent=0
    _
  %s8 = ssub.s32 1, %s6
  %s9 = scalar_select 0, %s8, %s6
  $region1: #{mlp_forward.1} parent=0
    #allocation2 [shape = 'u8[1048576]{0}', space=vmem, size = 0x100000, scoped, tag = 'input window, operand 0, single buffered']
    #allocation3 [shape = 's32[1]{0}', space=sflag, size = 0x4, scoped, tag = 'scoped memory for mlp_forward.1']
    #allocation4 [shape = 'u8[262144]{0}', space=vmem, size = 0x40000, scoped, tag = 'input window, operand 1, single buffered']
    #allocation5 [shape = 's32[1]{0}', space=sflag, size = 0x4, scoped, tag = 'scoped memory for mlp_forward.1']
    #allocation6 [shape = 'u8[32768]{0}', space=vmem, size = 0x8000, scoped, tag = 'input window, operand 3, single buffered']
    %10 = vsyncpa [#allocation3], 0
    %11 = vsyncpa [#allocation5], 0
    // Predicated region
    $region2: #{mlp_forward.1} parent=1 // pred_check
      _
    $region3: #{mlp_forward.1} parent=1 // pred_check_branch
      %13 = sbr.rel (0) target = $region5
    $region4: #{mlp_forward.1} parent=1 // pred_region
      %s15 = ssub.s32 32768, 32768
      %16 = vsyncadd [#allocation3], %s15
      %s17 = sshll.u32 [#allocation2], 4
      %s18 = int_to_ptr.vmem [resolvable:$true] %s17
      %23 = dma.hbm_to_vmem [thread:$0]  %s0, 32768, %s18, [#allocation3], 1024, 1024, 64
    $region5: #{mlp_forward.1} parent=1 // pred_fallthru
      _
    // Predicated region
    $region6: #{mlp_forward.1} parent=1 // pred_check
      _
    $region7: #{mlp_forward.1} parent=1 // pred_check_branch
      %25 = sbr.rel (0) target = $region9
    $region8: #{mlp_forward.1} parent=1 // pred_region
      %s27 = ssub.s32 8192, 8192
      %28 = vsyncadd [#allocation5], %s27
      %s29 = sshll.u32 [#allocation4], 4
      %s30 = int_to_ptr.vmem [resolvable:$true] %s29
      %35 = dma.hbm_to_vmem [thread:$0]  %s1, 8192, %s30, [#allocation5], 64, 64, 4
    $region9: #{mlp_forward.1} parent=1 // pred_fallthru
      _
    // Predicated region
    $region10: #{mlp_forward.1} parent=1 // pred_check
      _
    $region11: #{mlp_forward.1} parent=1 // pred_check_branch
      %37 = sbr.rel (0) target = $region13
    $region12: #{mlp_forward.1} parent=1 // pred_region
      _
    $region13: #{mlp_forward.1} parent=1 // pred_fallthru
      _
    // Predicated region
    $region14: #{mlp_forward.1} parent=1 // pred_check
      _
    $region15: #{mlp_forward.1} parent=1 // pred_check_branch
      %39 = sbr.rel (0) target = $region17
    $region16: #{mlp_forward.1} parent=1 // pred_region
      %s41 = ssub.s32 1024, 1024
      %42 = vsyncadd [#allocation5], %s41
      %s43 = sshll.u32 [#allocation6], 4
      %s44 = int_to_ptr.vmem [resolvable:$true] %s43
      %49 = dma.hbm_to_vmem [thread:$0]  %s3, 1024, %s44, [#allocation5], 64, 64, 4
    $region17: #{mlp_forward.1} parent=1 // pred_fallthru
      _
    // Predicated region
    $region18: #{mlp_forward.1} parent=1 // pred_check
      _
    $region19: #{mlp_forward.1} parent=1 // pred_check_branch
      %51 = sbr.rel (0) target = $region21
    $region20: #{mlp_forward.1} parent=1 // pred_region
      _
    $region21: #{mlp_forward.1} parent=1 // pred_fallthru
      _
    // Predicated region
    $region22: #{mlp_forward.1} parent=1 // pred_check
      _
    $region23: #{mlp_forward.1} parent=1 // pred_check_branch
      %53 = sbr.rel (0) target = $region25
    $region24: #{mlp_forward.1} parent=1 // pred_region
      %54 = dma.done [#allocation3], 32768
    $region25: #{mlp_forward.1} parent=1 // pred_fallthru
      _
    // Predicated region
    $region26: #{mlp_forward.1} parent=1 // pred_check
      _
    $region27: #{mlp_forward.1} parent=1 // pred_check_branch
      %56 = sbr.rel (0) target = $region29
    $region28: #{mlp_forward.1} parent=1 // pred_region
      %57 = dma.done [#allocation5], 8192
    $region29: #{mlp_forward.1} parent=1 // pred_fallthru
      _
    // Predicated region
    $region30: #{mlp_forward.1} parent=1 // pred_check
      _
    $region31: #{mlp_forward.1} parent=1 // pred_check_branch
      %59 = sbr.rel (0) target = $region33
    $region32: #{mlp_forward.1} parent=1 // pred_region
      %60 = dma.done [#allocation5], 1024
    $region33: #{mlp_forward.1} parent=1 // pred_fallthru
      _
    %v62 = vld [vmem:[#allocation2] sm:$0xff]
    %v63 = vld [vmem:[#allocation2 + $0x8] sm:$0xff]
    %v64 = vld [vmem:[#allocation2 + $0x10] sm:$0xff]
    %v65 = vld [vmem:[#allocation2 + $0x18] sm:$0xff]
    %v66 = vld [vmem:[#allocation2 + $0x20] sm:$0xff]
    %v67 = vld [vmem:[#allocation2 + $0x28] sm:$0xff]
    %v68 = vld [vmem:[#allocation2 + $0x30] sm:$0xff]
    %v69 = vld [vmem:[#allocation2 + $0x38] sm:$0xff]
    %v70 = vld [vmem:[#allocation2 + $0x40] sm:$0xff]
    %v71 = vld [vmem:[#allocation2 + $0x48] sm:$0xff]
    %v72 = vld [vmem:[#allocation2 + $0x50] sm:$0xff]
    %v73 = vld [vmem:[#allocation2 + $0x58] sm:$0xff]
    %v74 = vld [vmem:[#allocation2 + $0x60] sm:$0xff]
    %v75 = vld [vmem:[#allocation2 + $0x68] sm:$0xff]
    %v76 = vld [vmem:[#allocation2 + $0x70] sm:$0xff]
    %v77 = vld [vmem:[#allocation2 + $0x78] sm:$0xff]
    %v78 = vld [vmem:[#allocation2 + $0x80] sm:$0xff]
    %v79 = vld [vmem:[#allocation2 + $0x88] sm:$0xff]
    %v80 = vld [vmem:[#allocation2 + $0x90] sm:$0xff]
    %v81 = vld [vmem:[#allocation2 + $0x98] sm:$0xff]
    %v82 = vld [vmem:[#allocation2 + $0xa0] sm:$0xff]
    %v83 = vld [vmem:[#allocation2 + $0xa8] sm:$0xff]
    %v84 = vld [vmem:[#allocation2 + $0xb0] sm:$0xff]
    %v85 = vld [vmem:[#allocation2 + $0xb8] sm:$0xff]
    %v86 = vld [vmem:[#allocation2 + $0xc0] sm:$0xff]
    %v87 = vld [vmem:[#allocation2 + $0xc8] sm:$0xff]
    %v88 = vld [vmem:[#allocation2 + $0xd0] sm:$0xff]
    %v89 = vld [vmem:[#allocation2 + $0xd8] sm:$0xff]
    %v90 = vld [vmem:[#allocation2 + $0xe0] sm:$0xff]
    %v91 = vld [vmem:[#allocation2 + $0xe8] sm:$0xff]
    %v92 = vld [vmem:[#allocation2 + $0xf0] sm:$0xff]
    %v93 = vld [vmem:[#allocation2 + $0xf8] sm:$0xff]
    %v94 = vld [vmem:[#allocation2 + $0x100] sm:$0xff]
    %v95 = vld [vmem:[#allocation2 + $0x108] sm:$0xff]
    %v96 = vld [vmem:[#allocation2 + $0x110] sm:$0xff]
    %v97 = vld [vmem:[#allocation2 + $0x118] sm:$0xff]
    %v98 = vld [vmem:[#allocation2 + $0x120] sm:$0xff]
    %v99 = vld [vmem:[#allocation2 + $0x128] sm:$0xff]
    %v100 = vld [vmem:[#allocation2 + $0x130] sm:$0xff]
    %v101 = vld [vmem:[#allocation2 + $0x138] sm:$0xff]
    %v102 = vld [vmem:[#allocation2 + $0x140] sm:$0xff]
    %v103 = vld [vmem:[#allocation2 + $0x148] sm:$0xff]
    %v104 = vld [vmem:[#allocation2 + $0x150] sm:$0xff]
    %v105 = vld [vmem:[#allocation2 + $0x158] sm:$0xff]
    %v106 = vld [vmem:[#allocation2 + $0x160] sm:$0xff]
    %v107 = vld [vmem:[#allocation2 + $0x168] sm:$0xff]
    %v108 = vld [vmem:[#allocation2 + $0x170] sm:$0xff]
    %v109 = vld [vmem:[#allocation2 + $0x178] sm:$0xff]
    %v110 = vld [vmem:[#allocation2 + $0x180] sm:$0xff]
    %v111 = vld [vmem:[#allocation2 + $0x188] sm:$0xff]
    %v112 = vld [vmem:[#allocation2 + $0x190] sm:$0xff]
    %v113 = vld [vmem:[#allocation2 + $0x198] sm:$0xff]
    %v114 = vld [vmem:[#allocation2 + $0x1a0] sm:$0xff]
    %v115 = vld [vmem:[#allocation2 + $0x1a8] sm:$0xff]
    %v116 = vld [vmem:[#allocation2 + $0x1b0] sm:$0xff]
    %v117 = vld [vmem:[#allocation2 + $0x1b8] sm:$0xff]
    %v118 = vld [vmem:[#allocation2 + $0x1c0] sm:$0xff]
    %v119 = vld [vmem:[#allocation2 + $0x1c8] sm:$0xff]
    %v120 = vld [vmem:[#allocation2 + $0x1d0] sm:$0xff]
    %v121 = vld [vmem:[#allocation2 + $0x1d8] sm:$0xff]
    %v122 = vld [vmem:[#allocation2 + $0x1e0] sm:$0xff]
    %v123 = vld [vmem:[#allocation2 + $0x1e8] sm:$0xff]
    %v124 = vld [vmem:[#allocation2 + $0x1f0] sm:$0xff]
    %v125 = vld [vmem:[#allocation2 + $0x1f8] sm:$0xff]
    %v126 = vld [vmem:[#allocation2 + $0x200] sm:$0xff]
    %v127 = vld [vmem:[#allocation2 + $0x208] sm:$0xff]
    %v128 = vld [vmem:[#allocation2 + $0x210] sm:$0xff]
    %v129 = vld [vmem:[#allocation2 + $0x218] sm:$0xff]
    %v130 = vld [vmem:[#allocation2 + $0x220] sm:$0xff]
    %v131 = vld [vmem:[#allocation2 + $0x228] sm:$0xff]
    %v132 = vld [vmem:[#allocation2 + $0x230] sm:$0xff]
    %v133 = vld [vmem:[#allocation2 + $0x238] sm:$0xff]
    %v134 = vld [vmem:[#allocation2 + $0x240] sm:$0xff]
    %v135 = vld [vmem:[#allocation2 + $0x248] sm:$0xff]
    %v136 = vld [vmem:[#allocation2 + $0x250] sm:$0xff]
    %v137 = vld [vmem:[#allocation2 + $0x258] sm:$0xff]
    %v138 = vld [vmem:[#allocation2 + $0x260] sm:$0xff]
    %v139 = vld [vmem:[#allocation2 + $0x268] sm:$0xff]
    %v140 = vld [vmem:[#allocation2 + $0x270] sm:$0xff]
    %v141 = vld [vmem:[#allocation2 + $0x278] sm:$0xff]
    %v142 = vld [vmem:[#allocation2 + $0x280] sm:$0xff]
    %v143 = vld [vmem:[#allocation2 + $0x288] sm:$0xff]
    %v144 = vld [vmem:[#allocation2 + $0x290] sm:$0xff]
    %v145 = vld [vmem:[#allocation2 + $0x298] sm:$0xff]
    %v146 = vld [vmem:[#allocation2 + $0x2a0] sm:$0xff]
    %v147 = vld [vmem:[#allocation2 + $0x2a8] sm:$0xff]
    %v148 = vld [vmem:[#allocation2 + $0x2b0] sm:$0xff]
    %v149 = vld [vmem:[#allocation2 + $0x2b8] sm:$0xff]
    %v150 = vld [vmem:[#allocation2 + $0x2c0] sm:$0xff]
    %v151 = vld [vmem:[#allocation2 + $0x2c8] sm:$0xff]
    %v152 = vld [vmem:[#allocation2 + $0x2d0] sm:$0xff]
    %v153 = vld [vmem:[#allocation2 + $0x2d8] sm:$0xff]
    %v154 = vld [vmem:[#allocation2 + $0x2e0] sm:$0xff]
    %v155 = vld [vmem:[#allocation2 + $0x2e8] sm:$0xff]
    %v156 = vld [vmem:[#allocation2 + $0x2f0] sm:$0xff]
    %v157 = vld [vmem:[#allocation2 + $0x2f8] sm:$0xff]
    %v158 = vld [vmem:[#allocation2 + $0x300] sm:$0xff]
    %v159 = vld [vmem:[#allocation2 + $0x308] sm:$0xff]
    %v160 = vld [vmem:[#allocation2 + $0x310] sm:$0xff]
    %v161 = vld [vmem:[#allocation2 + $0x318] sm:$0xff]
    %v162 = vld [vmem:[#allocation2 + $0x320] sm:$0xff]
    %v163 = vld [vmem:[#allocation2 + $0x328] sm:$0xff]
    %v164 = vld [vmem:[#allocation2 + $0x330] sm:$0xff]
    %v165 = vld [vmem:[#allocation2 + $0x338] sm:$0xff]
    %v166 = vld [vmem:[#allocation2 + $0x340] sm:$0xff]
    %v167 = vld [vmem:[#allocation2 + $0x348] sm:$0xff]
    %v168 = vld [vmem:[#allocation2 + $0x350] sm:$0xff]
    %v169 = vld [vmem:[#allocation2 + $0x358] sm:$0xff]
    %v170 = vld [vmem:[#allocation2 + $0x360] sm:$0xff]
    %v171 = vld [vmem:[#allocation2 + $0x368] sm:$0xff]
    %v172 = vld [vmem:[#allocation2 + $0x370] sm:$0xff]
    %v173 = vld [vmem:[#allocation2 + $0x378] sm:$0xff]
    %v174 = vld [vmem:[#allocation2 + $0x380] sm:$0xff]
    %v175 = vld [vmem:[#allocation2 + $0x388] sm:$0xff]
    %v176 = vld [vmem:[#allocation2 + $0x390] sm:$0xff]
    %v177 = vld [vmem:[#allocation2 + $0x398] sm:$0xff]
    %v178 = vld [vmem:[#allocation2 + $0x3a0] sm:$0xff]
    %v179 = vld [vmem:[#allocation2 + $0x3a8] sm:$0xff]
    %v180 = vld [vmem:[#allocation2 + $0x3b0] sm:$0xff]
    %v181 = vld [vmem:[#allocation2 + $0x3b8] sm:$0xff]
    %v182 = vld [vmem:[#allocation2 + $0x3c0] sm:$0xff]
    %v183 = vld [vmem:[#allocation2 + $0x3c8] sm:$0xff]
    %v184 = vld [vmem:[#allocation2 + $0x3d0] sm:$0xff]
    %v185 = vld [vmem:[#allocation2 + $0x3d8] sm:$0xff]
    %v186 = vld [vmem:[#allocation2 + $0x3e0] sm:$0xff]
    %v187 = vld [vmem:[#allocation2 + $0x3e8] sm:$0xff]
    %v188 = vld [vmem:[#allocation2 + $0x3f0] sm:$0xff]
    %v189 = vld [vmem:[#allocation2 + $0x3f8] sm:$0xff]
    %v190 = vld [vmem:[#allocation2 + $0x400] sm:$0xff]
    %v191 = vld [vmem:[#allocation2 + $0x408] sm:$0xff]
    %v192 = vld [vmem:[#allocation2 + $0x410] sm:$0xff]
    %v193 = vld [vmem:[#allocation2 + $0x418] sm:$0xff]
    %v194 = vld [vmem:[#allocation2 + $0x420] sm:$0xff]
    %v195 = vld [vmem:[#allocation2 + $0x428] sm:$0xff]
    %v196 = vld [vmem:[#allocation2 + $0x430] sm:$0xff]
    %v197 = vld [vmem:[#allocation2 + $0x438] sm:$0xff]
    %v198 = vld [vmem:[#allocation2 + $0x440] sm:$0xff]
    %v199 = vld [vmem:[#allocation2 + $0x448] sm:$0xff]
    %v200 = vld [vmem:[#allocation2 + $0x450] sm:$0xff]
    %v201 = vld [vmem:[#allocation2 + $0x458] sm:$0xff]
    %v202 = vld [vmem:[#allocation2 + $0x460] sm:$0xff]
    %v203 = vld [vmem:[#allocation2 + $0x468] sm:$0xff]
    %v204 = vld [vmem:[#allocation2 + $0x470] sm:$0xff]
    %v205 = vld [vmem:[#allocation2 + $0x478] sm:$0xff]
    %v206 = vld [vmem:[#allocation2 + $0x480] sm:$0xff]
    %v207 = vld [vmem:[#allocation2 + $0x488] sm:$0xff]
    %v208 = vld [vmem:[#allocation2 + $0x490] sm:$0xff]
    %v209 = vld [vmem:[#allocation2 + $0x498] sm:$0xff]
    %v210 = vld [vmem:[#allocation2 + $0x4a0] sm:$0xff]
    %v211 = vld [vmem:[#allocation2 + $0x4a8] sm:$0xff]
    %v212 = vld [vmem:[#allocation2 + $0x4b0] sm:$0xff]
    %v213 = vld [vmem:[#allocation2 + $0x4b8] sm:$0xff]
    %v214 = vld [vmem:[#allocation2 + $0x4c0] sm:$0xff]
    %v215 = vld [vmem:[#allocation2 + $0x4c8] sm:$0xff]
    %v216 = vld [vmem:[#allocation2 + $0x4d0] sm:$0xff]
    %v217 = vld [vmem:[#allocation2 + $0x4d8] sm:$0xff]
    %v218 = vld [vmem:[#allocation2 + $0x4e0] sm:$0xff]
    %v219 = vld [vmem:[#allocation2 + $0x4e8] sm:$0xff]
    %v220 = vld [vmem:[#allocation2 + $0x4f0] sm:$0xff]
    %v221 = vld [vmem:[#allocation2 + $0x4f8] sm:$0xff]
    %v222 = vld [vmem:[#allocation2 + $0x500] sm:$0xff]
    %v223 = vld [vmem:[#allocation2 + $0x508] sm:$0xff]
    %v224 = vld [vmem:[#allocation2 + $0x510] sm:$0xff]
    %v225 = vld [vmem:[#allocation2 + $0x518] sm:$0xff]
    %v226 = vld [vmem:[#allocation2 + $0x520] sm:$0xff]
    %v227 = vld [vmem:[#allocation2 + $0x528] sm:$0xff]
    %v228 = vld [vmem:[#allocation2 + $0x530] sm:$0xff]
    %v229 = vld [vmem:[#allocation2 + $0x538] sm:$0xff]
    %v230 = vld [vmem:[#allocation2 + $0x540] sm:$0xff]
    %v231 = vld [vmem:[#allocation2 + $0x548] sm:$0xff]
    %v232 = vld [vmem:[#allocation2 + $0x550] sm:$0xff]
    %v233 = vld [vmem:[#allocation2 + $0x558] sm:$0xff]
    %v234 = vld [vmem:[#allocation2 + $0x560] sm:$0xff]
    %v235 = vld [vmem:[#allocation2 + $0x568] sm:$0xff]
    %v236 = vld [vmem:[#allocation2 + $0x570] sm:$0xff]
    %v237 = vld [vmem:[#allocation2 + $0x578] sm:$0xff]
    %v238 = vld [vmem:[#allocation2 + $0x580] sm:$0xff]
    %v239 = vld [vmem:[#allocation2 + $0x588] sm:$0xff]
    %v240 = vld [vmem:[#allocation2 + $0x590] sm:$0xff]
    %v241 = vld [vmem:[#allocation2 + $0x598] sm:$0xff]
    %v242 = vld [vmem:[#allocation2 + $0x5a0] sm:$0xff]
    %v243 = vld [vmem:[#allocation2 + $0x5a8] sm:$0xff]
    %v244 = vld [vmem:[#allocation2 + $0x5b0] sm:$0xff]
    %v245 = vld [vmem:[#allocation2 + $0x5b8] sm:$0xff]
    %v246 = vld [vmem:[#allocation2 + $0x5c0] sm:$0xff]
    %v247 = vld [vmem:[#allocation2 + $0x5c8] sm:$0xff]
    %v248 = vld [vmem:[#allocation2 + $0x5d0] sm:$0xff]
    %v249 = vld [vmem:[#allocation2 + $0x5d8] sm:$0xff]
    %v250 = vld [vmem:[#allocation2 + $0x5e0] sm:$0xff]
    %v251 = vld [vmem:[#allocation2 + $0x5e8] sm:$0xff]
    %v252 = vld [vmem:[#allocation2 + $0x5f0] sm:$0xff]
    %v253 = vld [vmem:[#allocation2 + $0x5f8] sm:$0xff]
    %v254 = vld [vmem:[#allocation2 + $0x600] sm:$0xff]
    %v255 = vld [vmem:[#allocation2 + $0x608] sm:$0xff]
    %v256 = vld [vmem:[#allocation2 + $0x610] sm:$0xff]
    %v257 = vld [vmem:[#allocation2 + $0x618] sm:$0xff]
    %v258 = vld [vmem:[#allocation2 + $0x620] sm:$0xff]
    %v259 = vld [vmem:[#allocation2 + $0x628] sm:$0xff]
    %v260 = vld [vmem:[#allocation2 + $0x630] sm:$0xff]
    %v261 = vld [vmem:[#allocation2 + $0x638] sm:$0xff]
    %v262 = vld [vmem:[#allocation2 + $0x640] sm:$0xff]
    %v263 = vld [vmem:[#allocation2 + $0x648] sm:$0xff]
    %v264 = vld [vmem:[#allocation2 + $0x650] sm:$0xff]
    %v265 = vld [vmem:[#allocation2 + $0x658] sm:$0xff]
    %v266 = vld [vmem:[#allocation2 + $0x660] sm:$0xff]
    %v267 = vld [vmem:[#allocation2 + $0x668] sm:$0xff]
    %v268 = vld [vmem:[#allocation2 + $0x670] sm:$0xff]
    %v269 = vld [vmem:[#allocation2 + $0x678] sm:$0xff]
    %v270 = vld [vmem:[#allocation2 + $0x680] sm:$0xff]
    %v271 = vld [vmem:[#allocation2 + $0x688] sm:$0xff]
    %v272 = vld [vmem:[#allocation2 + $0x690] sm:$0xff]
    %v273 = vld [vmem:[#allocation2 + $0x698] sm:$0xff]
    %v274 = vld [vmem:[#allocation2 + $0x6a0] sm:$0xff]
    %v275 = vld [vmem:[#allocation2 + $0x6a8] sm:$0xff]
    %v276 = vld [vmem:[#allocation2 + $0x6b0] sm:$0xff]
    %v277 = vld [vmem:[#allocation2 + $0x6b8] sm:$0xff]
    %v278 = vld [vmem:[#allocation2 + $0x6c0] sm:$0xff]
    %v279 = vld [vmem:[#allocation2 + $0x6c8] sm:$0xff]
    %v280 = vld [vmem:[#allocation2 + $0x6d0] sm:$0xff]
    %v281 = vld [vmem:[#allocation2 + $0x6d8] sm:$0xff]
    %v282 = vld [vmem:[#allocation2 + $0x6e0] sm:$0xff]
    %v283 = vld [vmem:[#allocation2 + $0x6e8] sm:$0xff]
    %v284 = vld [vmem:[#allocation2 + $0x6f0] sm:$0xff]
    %v285 = vld [vmem:[#allocation2 + $0x6f8] sm:$0xff]
    %v286 = vld [vmem:[#allocation2 + $0x700] sm:$0xff]
    %v287 = vld [vmem:[#allocation2 + $0x708] sm:$0xff]
    %v288 = vld [vmem:[#allocation2 + $0x710] sm:$0xff]
    %v289 = vld [vmem:[#allocation2 + $0x718] sm:$0xff]
    %v290 = vld [vmem:[#allocation2 + $0x720] sm:$0xff]
    %v291 = vld [vmem:[#allocation2 + $0x728] sm:$0xff]
    %v292 = vld [vmem:[#allocation2 + $0x730] sm:$0xff]
    %v293 = vld [vmem:[#allocation2 + $0x738] sm:$0xff]
    %v294 = vld [vmem:[#allocation2 + $0x740] sm:$0xff]
    %v295 = vld [vmem:[#allocation2 + $0x748] sm:$0xff]
    %v296 = vld [vmem:[#allocation2 + $0x750] sm:$0xff]
    %v297 = vld [vmem:[#allocation2 + $0x758] sm:$0xff]
    %v298 = vld [vmem:[#allocation2 + $0x760] sm:$0xff]
    %v299 = vld [vmem:[#allocation2 + $0x768] sm:$0xff]
    %v300 = vld [vmem:[#allocation2 + $0x770] sm:$0xff]
    %v301 = vld [vmem:[#allocation2 + $0x778] sm:$0xff]
    %v302 = vld [vmem:[#allocation2 + $0x780] sm:$0xff]
    %v303 = vld [vmem:[#allocation2 + $0x788] sm:$0xff]
    %v304 = vld [vmem:[#allocation2 + $0x790] sm:$0xff]
    %v305 = vld [vmem:[#allocation2 + $0x798] sm:$0xff]
    %v306 = vld [vmem:[#allocation2 + $0x7a0] sm:$0xff]
    %v307 = vld [vmem:[#allocation2 + $0x7a8] sm:$0xff]
    %v308 = vld [vmem:[#allocation2 + $0x7b0] sm:$0xff]
    %v309 = vld [vmem:[#allocation2 + $0x7b8] sm:$0xff]
    %v310 = vld [vmem:[#allocation2 + $0x7c0] sm:$0xff]
    %v311 = vld [vmem:[#allocation2 + $0x7c8] sm:$0xff]
    %v312 = vld [vmem:[#allocation2 + $0x7d0] sm:$0xff]
    %v313 = vld [vmem:[#allocation2 + $0x7d8] sm:$0xff]
    %v314 = vld [vmem:[#allocation2 + $0x7e0] sm:$0xff]
    %v315 = vld [vmem:[#allocation2 + $0x7e8] sm:$0xff]
    %v316 = vld [vmem:[#allocation2 + $0x7f0] sm:$0xff]
    %v317 = vld [vmem:[#allocation2 + $0x7f8] sm:$0xff]
    %v318 = vpack.c.bf16 %v70, %v62
    %v319 = vpack.c.bf16 %v71, %v63
    %v320 = vpack.c.bf16 %v72, %v64
    %v321 = vpack.c.bf16 %v73, %v65
    %v322 = vpack.c.bf16 %v74, %v66
    %v323 = vpack.c.bf16 %v75, %v67
    %v324 = vpack.c.bf16 %v76, %v68
    %v325 = vpack.c.bf16 %v77, %v69
    %v326 = vpack.c.bf16 %v86, %v78
    %v327 = vpack.c.bf16 %v87, %v79
    %v328 = vpack.c.bf16 %v88, %v80
    %v329 = vpack.c.bf16 %v89, %v81
    %v330 = vpack.c.bf16 %v90, %v82
    %v331 = vpack.c.bf16 %v91, %v83
    %v332 = vpack.c.bf16 %v92, %v84
    %v333 = vpack.c.bf16 %v93, %v85
    %v334 = vpack.c.bf16 %v102, %v94
    %v335 = vpack.c.bf16 %v103, %v95
    %v336 = vpack.c.bf16 %v104, %v96
    %v337 = vpack.c.bf16 %v105, %v97
    %v338 = vpack.c.bf16 %v106, %v98
    %v339 = vpack.c.bf16 %v107, %v99
    %v340 = vpack.c.bf16 %v108, %v100
    %v341 = vpack.c.bf16 %v109, %v101
    %v342 = vpack.c.bf16 %v118, %v110
    %v343 = vpack.c.bf16 %v119, %v111
    %v344 = vpack.c.bf16 %v120, %v112
    %v345 = vpack.c.bf16 %v121, %v113
    %v346 = vpack.c.bf16 %v122, %v114
    %v347 = vpack.c.bf16 %v123, %v115
    %v348 = vpack.c.bf16 %v124, %v116
    %v349 = vpack.c.bf16 %v125, %v117
    %v350 = vpack.c.bf16 %v134, %v126
    %v351 = vpack.c.bf16 %v135, %v127
    %v352 = vpack.c.bf16 %v136, %v128
    %v353 = vpack.c.bf16 %v137, %v129
    %v354 = vpack.c.bf16 %v138, %v130
    %v355 = vpack.c.bf16 %v139, %v131
    %v356 = vpack.c.bf16 %v140, %v132
    %v357 = vpack.c.bf16 %v141, %v133
    %v358 = vpack.c.bf16 %v150, %v142
    %v359 = vpack.c.bf16 %v151, %v143
    %v360 = vpack.c.bf16 %v152, %v144
    %v361 = vpack.c.bf16 %v153, %v145
    %v362 = vpack.c.bf16 %v154, %v146
    %v363 = vpack.c.bf16 %v155, %v147
    %v364 = vpack.c.bf16 %v156, %v148
    %v365 = vpack.c.bf16 %v157, %v149
    %v366 = vpack.c.bf16 %v166, %v158
    %v367 = vpack.c.bf16 %v167, %v159
    %v368 = vpack.c.bf16 %v168, %v160
    %v369 = vpack.c.bf16 %v169, %v161
    %v370 = vpack.c.bf16 %v170, %v162
    %v371 = vpack.c.bf16 %v171, %v163
    %v372 = vpack.c.bf16 %v172, %v164
    %v373 = vpack.c.bf16 %v173, %v165
    %v374 = vpack.c.bf16 %v182, %v174
    %v375 = vpack.c.bf16 %v183, %v175
    %v376 = vpack.c.bf16 %v184, %v176
    %v377 = vpack.c.bf16 %v185, %v177
    %v378 = vpack.c.bf16 %v186, %v178
    %v379 = vpack.c.bf16 %v187, %v179
    %v380 = vpack.c.bf16 %v188, %v180
    %v381 = vpack.c.bf16 %v189, %v181
    %v382 = vpack.c.bf16 %v198, %v190
    %v383 = vpack.c.bf16 %v199, %v191
    %v384 = vpack.c.bf16 %v200, %v192
    %v385 = vpack.c.bf16 %v201, %v193
    %v386 = vpack.c.bf16 %v202, %v194
    %v387 = vpack.c.bf16 %v203, %v195
    %v388 = vpack.c.bf16 %v204, %v196
    %v389 = vpack.c.bf16 %v205, %v197
    %v390 = vpack.c.bf16 %v214, %v206
    %v391 = vpack.c.bf16 %v215, %v207
    %v392 = vpack.c.bf16 %v216, %v208
    %v393 = vpack.c.bf16 %v217, %v209
    %v394 = vpack.c.bf16 %v218, %v210
    %v395 = vpack.c.bf16 %v219, %v211
    %v396 = vpack.c.bf16 %v220, %v212
    %v397 = vpack.c.bf16 %v221, %v213
    %v398 = vpack.c.bf16 %v230, %v222
    %v399 = vpack.c.bf16 %v231, %v223
    %v400 = vpack.c.bf16 %v232, %v224
    %v401 = vpack.c.bf16 %v233, %v225
    %v402 = vpack.c.bf16 %v234, %v226
    %v403 = vpack.c.bf16 %v235, %v227
    %v404 = vpack.c.bf16 %v236, %v228
    %v405 = vpack.c.bf16 %v237, %v229
    %v406 = vpack.c.bf16 %v246, %v238
    %v407 = vpack.c.bf16 %v247, %v239
    %v408 = vpack.c.bf16 %v248, %v240
    %v409 = vpack.c.bf16 %v249, %v241
    %v410 = vpack.c.bf16 %v250, %v242
    %v411 = vpack.c.bf16 %v251, %v243
    %v412 = vpack.c.bf16 %v252, %v244
    %v413 = vpack.c.bf16 %v253, %v245
    %v414 = vpack.c.bf16 %v262, %v254
    %v415 = vpack.c.bf16 %v263, %v255
    %v416 = vpack.c.bf16 %v264, %v256
    %v417 = vpack.c.bf16 %v265, %v257
    %v418 = vpack.c.bf16 %v266, %v258
    %v419 = vpack.c.bf16 %v267, %v259
    %v420 = vpack.c.bf16 %v268, %v260
    %v421 = vpack.c.bf16 %v269, %v261
    %v422 = vpack.c.bf16 %v278, %v270
    %v423 = vpack.c.bf16 %v279, %v271
    %v424 = vpack.c.bf16 %v280, %v272
    %v425 = vpack.c.bf16 %v281, %v273
    %v426 = vpack.c.bf16 %v282, %v274
    %v427 = vpack.c.bf16 %v283, %v275
    %v428 = vpack.c.bf16 %v284, %v276
    %v429 = vpack.c.bf16 %v285, %v277
    %v430 = vpack.c.bf16 %v294, %v286
    %v431 = vpack.c.bf16 %v295, %v287
    %v432 = vpack.c.bf16 %v296, %v288
    %v433 = vpack.c.bf16 %v297, %v289
    %v434 = vpack.c.bf16 %v298, %v290
    %v435 = vpack.c.bf16 %v299, %v291
    %v436 = vpack.c.bf16 %v300, %v292
    %v437 = vpack.c.bf16 %v301, %v293
    %v438 = vpack.c.bf16 %v310, %v302
    %v439 = vpack.c.bf16 %v311, %v303
    %v440 = vpack.c.bf16 %v312, %v304
    %v441 = vpack.c.bf16 %v313, %v305
    %v442 = vpack.c.bf16 %v314, %v306
    %v443 = vpack.c.bf16 %v315, %v307
    %v444 = vpack.c.bf16 %v316, %v308
    %v445 = vpack.c.bf16 %v317, %v309
    %v446 = vld [vmem:[#allocation4] sm:$0xf]
    %v447 = vld [vmem:[#allocation4 + $0x4] sm:$0xf]
    %v448 = vld [vmem:[#allocation4 + $0x8] sm:$0xf]
    %v449 = vld [vmem:[#allocation4 + $0xc] sm:$0xf]
    %v450 = vld [vmem:[#allocation4 + $0x10] sm:$0xf]
    %v451 = vld [vmem:[#allocation4 + $0x14] sm:$0xf]
    %v452 = vld [vmem:[#allocation4 + $0x18] sm:$0xf]
    %v453 = vld [vmem:[#allocation4 + $0x1c] sm:$0xf]
    %v454 = vld [vmem:[#allocation4 + $0x20] sm:$0xf]
    %v455 = vld [vmem:[#allocation4 + $0x24] sm:$0xf]
    %v456 = vld [vmem:[#allocation4 + $0x28] sm:$0xf]
    %v457 = vld [vmem:[#allocation4 + $0x2c] sm:$0xf]
    %v458 = vld [vmem:[#allocation4 + $0x30] sm:$0xf]
    %v459 = vld [vmem:[#allocation4 + $0x34] sm:$0xf]
    %v460 = vld [vmem:[#allocation4 + $0x38] sm:$0xf]
    %v461 = vld [vmem:[#allocation4 + $0x3c] sm:$0xf]
    %v462 = vld [vmem:[#allocation4 + $0x40] sm:$0xf]
    %v463 = vld [vmem:[#allocation4 + $0x44] sm:$0xf]
    %v464 = vld [vmem:[#allocation4 + $0x48] sm:$0xf]
    %v465 = vld [vmem:[#allocation4 + $0x4c] sm:$0xf]
    %v466 = vld [vmem:[#allocation4 + $0x50] sm:$0xf]
    %v467 = vld [vmem:[#allocation4 + $0x54] sm:$0xf]
    %v468 = vld [vmem:[#allocation4 + $0x58] sm:$0xf]
    %v469 = vld [vmem:[#allocation4 + $0x5c] sm:$0xf]
    %v470 = vld [vmem:[#allocation4 + $0x60] sm:$0xf]
    %v471 = vld [vmem:[#allocation4 + $0x64] sm:$0xf]
    %v472 = vld [vmem:[#allocation4 + $0x68] sm:$0xf]
    %v473 = vld [vmem:[#allocation4 + $0x6c] sm:$0xf]
    %v474 = vld [vmem:[#allocation4 + $0x70] sm:$0xf]
    %v475 = vld [vmem:[#allocation4 + $0x74] sm:$0xf]
    %v476 = vld [vmem:[#allocation4 + $0x78] sm:$0xf]
    %v477 = vld [vmem:[#allocation4 + $0x7c] sm:$0xf]
    %v478 = vld [vmem:[#allocation4 + $0x80] sm:$0xf]
    %v479 = vld [vmem:[#allocation4 + $0x84] sm:$0xf]
    %v480 = vld [vmem:[#allocation4 + $0x88] sm:$0xf]
    %v481 = vld [vmem:[#allocation4 + $0x8c] sm:$0xf]
    %v482 = vld [vmem:[#allocation4 + $0x90] sm:$0xf]
    %v483 = vld [vmem:[#allocation4 + $0x94] sm:$0xf]
    %v484 = vld [vmem:[#allocation4 + $0x98] sm:$0xf]
    %v485 = vld [vmem:[#allocation4 + $0x9c] sm:$0xf]
    %v486 = vld [vmem:[#allocation4 + $0xa0] sm:$0xf]
    %v487 = vld [vmem:[#allocation4 + $0xa4] sm:$0xf]
    %v488 = vld [vmem:[#allocation4 + $0xa8] sm:$0xf]
    %v489 = vld [vmem:[#allocation4 + $0xac] sm:$0xf]
    %v490 = vld [vmem:[#allocation4 + $0xb0] sm:$0xf]
    %v491 = vld [vmem:[#allocation4 + $0xb4] sm:$0xf]
    %v492 = vld [vmem:[#allocation4 + $0xb8] sm:$0xf]
    %v493 = vld [vmem:[#allocation4 + $0xbc] sm:$0xf]
    %v494 = vld [vmem:[#allocation4 + $0xc0] sm:$0xf]
    %v495 = vld [vmem:[#allocation4 + $0xc4] sm:$0xf]
    %v496 = vld [vmem:[#allocation4 + $0xc8] sm:$0xf]
    %v497 = vld [vmem:[#allocation4 + $0xcc] sm:$0xf]
    %v498 = vld [vmem:[#allocation4 + $0xd0] sm:$0xf]
    %v499 = vld [vmem:[#allocation4 + $0xd4] sm:$0xf]
    %v500 = vld [vmem:[#allocation4 + $0xd8] sm:$0xf]
    %v501 = vld [vmem:[#allocation4 + $0xdc] sm:$0xf]
    %v502 = vld [vmem:[#allocation4 + $0xe0] sm:$0xf]
    %v503 = vld [vmem:[#allocation4 + $0xe4] sm:$0xf]
    %v504 = vld [vmem:[#allocation4 + $0xe8] sm:$0xf]
    %v505 = vld [vmem:[#allocation4 + $0xec] sm:$0xf]
    %v506 = vld [vmem:[#allocation4 + $0xf0] sm:$0xf]
    %v507 = vld [vmem:[#allocation4 + $0xf4] sm:$0xf]
    %v508 = vld [vmem:[#allocation4 + $0xf8] sm:$0xf]
    %v509 = vld [vmem:[#allocation4 + $0xfc] sm:$0xf]
    %v510 = vld [vmem:[#allocation4 + $0x100] sm:$0xf]
    %v511 = vld [vmem:[#allocation4 + $0x104] sm:$0xf]
    %v512 = vld [vmem:[#allocation4 + $0x108] sm:$0xf]
    %v513 = vld [vmem:[#allocation4 + $0x10c] sm:$0xf]
    %v514 = vld [vmem:[#allocation4 + $0x110] sm:$0xf]
    %v515 = vld [vmem:[#allocation4 + $0x114] sm:$0xf]
    %v516 = vld [vmem:[#allocation4 + $0x118] sm:$0xf]
    %v517 = vld [vmem:[#allocation4 + $0x11c] sm:$0xf]
    %v518 = vld [vmem:[#allocation4 + $0x120] sm:$0xf]
    %v519 = vld [vmem:[#allocation4 + $0x124] sm:$0xf]
    %v520 = vld [vmem:[#allocation4 + $0x128] sm:$0xf]
    %v521 = vld [vmem:[#allocation4 + $0x12c] sm:$0xf]
    %v522 = vld [vmem:[#allocation4 + $0x130] sm:$0xf]
    %v523 = vld [vmem:[#allocation4 + $0x134] sm:$0xf]
    %v524 = vld [vmem:[#allocation4 + $0x138] sm:$0xf]
    %v525 = vld [vmem:[#allocation4 + $0x13c] sm:$0xf]
    %v526 = vld [vmem:[#allocation4 + $0x140] sm:$0xf]
    %v527 = vld [vmem:[#allocation4 + $0x144] sm:$0xf]
    %v528 = vld [vmem:[#allocation4 + $0x148] sm:$0xf]
    %v529 = vld [vmem:[#allocation4 + $0x14c] sm:$0xf]
    %v530 = vld [vmem:[#allocation4 + $0x150] sm:$0xf]
    %v531 = vld [vmem:[#allocation4 + $0x154] sm:$0xf]
    %v532 = vld [vmem:[#allocation4 + $0x158] sm:$0xf]
    %v533 = vld [vmem:[#allocation4 + $0x15c] sm:$0xf]
    %v534 = vld [vmem:[#allocation4 + $0x160] sm:$0xf]
    %v535 = vld [vmem:[#allocation4 + $0x164] sm:$0xf]
    %v536 = vld [vmem:[#allocation4 + $0x168] sm:$0xf]
    %v537 = vld [vmem:[#allocation4 + $0x16c] sm:$0xf]
    %v538 = vld [vmem:[#allocation4 + $0x170] sm:$0xf]
    %v539 = vld [vmem:[#allocation4 + $0x174] sm:$0xf]
    %v540 = vld [vmem:[#allocation4 + $0x178] sm:$0xf]
    %v541 = vld [vmem:[#allocation4 + $0x17c] sm:$0xf]
    %v542 = vld [vmem:[#allocation4 + $0x180] sm:$0xf]
    %v543 = vld [vmem:[#allocation4 + $0x184] sm:$0xf]
    %v544 = vld [vmem:[#allocation4 + $0x188] sm:$0xf]
    %v545 = vld [vmem:[#allocation4 + $0x18c] sm:$0xf]
    %v546 = vld [vmem:[#allocation4 + $0x190] sm:$0xf]
    %v547 = vld [vmem:[#allocation4 + $0x194] sm:$0xf]
    %v548 = vld [vmem:[#allocation4 + $0x198] sm:$0xf]
    %v549 = vld [vmem:[#allocation4 + $0x19c] sm:$0xf]
    %v550 = vld [vmem:[#allocation4 + $0x1a0] sm:$0xf]
    %v551 = vld [vmem:[#allocation4 + $0x1a4] sm:$0xf]
    %v552 = vld [vmem:[#allocation4 + $0x1a8] sm:$0xf]
    %v553 = vld [vmem:[#allocation4 + $0x1ac] sm:$0xf]
    %v554 = vld [vmem:[#allocation4 + $0x1b0] sm:$0xf]
    %v555 = vld [vmem:[#allocation4 + $0x1b4] sm:$0xf]
    %v556 = vld [vmem:[#allocation4 + $0x1b8] sm:$0xf]
    %v557 = vld [vmem:[#allocation4 + $0x1bc] sm:$0xf]
    %v558 = vld [vmem:[#allocation4 + $0x1c0] sm:$0xf]
    %v559 = vld [vmem:[#allocation4 + $0x1c4] sm:$0xf]
    %v560 = vld [vmem:[#allocation4 + $0x1c8] sm:$0xf]
    %v561 = vld [vmem:[#allocation4 + $0x1cc] sm:$0xf]
    %v562 = vld [vmem:[#allocation4 + $0x1d0] sm:$0xf]
    %v563 = vld [vmem:[#allocation4 + $0x1d4] sm:$0xf]
    %v564 = vld [vmem:[#allocation4 + $0x1d8] sm:$0xf]
    %v565 = vld [vmem:[#allocation4 + $0x1dc] sm:$0xf]
    %v566 = vld [vmem:[#allocation4 + $0x1e0] sm:$0xf]
    %v567 = vld [vmem:[#allocation4 + $0x1e4] sm:$0xf]
    %v568 = vld [vmem:[#allocation4 + $0x1e8] sm:$0xf]
    %v569 = vld [vmem:[#allocation4 + $0x1ec] sm:$0xf]
    %v570 = vld [vmem:[#allocation4 + $0x1f0] sm:$0xf]
    %v571 = vld [vmem:[#allocation4 + $0x1f4] sm:$0xf]
    %v572 = vld [vmem:[#allocation4 + $0x1f8] sm:$0xf]
    %v573 = vld [vmem:[#allocation4 + $0x1fc] sm:$0xf]
    %v574 = vld [vmem:[%s2] sm:$0x1]
    %v576 = vlaneseq
    %v577 = vshrl.u32 %v576, 7
    %v578 = vsub.s32 0, %v577
    %v579 = vrot.slane %v574, %v578
    %v709 = vunpack.c.l.b16 %v446
    %v710 = vunpack.c.l.b16 %v447
    %v711 = vunpack.c.l.b16 %v448
    %v712 = vunpack.c.l.b16 %v449
    %v713 = vunpack.c.l.b16 %v450
    %v714 = vunpack.c.l.b16 %v451
    %v715 = vunpack.c.l.b16 %v452
    %v716 = vunpack.c.l.b16 %v453
    %v717 = vunpack.c.l.b16 %v454
    %v718 = vunpack.c.l.b16 %v455
    %v719 = vunpack.c.l.b16 %v456
    %v720 = vunpack.c.l.b16 %v457
    %v721 = vunpack.c.l.b16 %v458
    %v722 = vunpack.c.l.b16 %v459
    %v723 = vunpack.c.l.b16 %v460
    %v724 = vunpack.c.l.b16 %v461
    %v725 = vunpack.c.l.b16 %v462
    %v726 = vunpack.c.l.b16 %v463
    %v727 = vunpack.c.l.b16 %v464
    %v728 = vunpack.c.l.b16 %v465
    %v729 = vunpack.c.l.b16 %v466
    %v730 = vunpack.c.l.b16 %v467
    %v731 = vunpack.c.l.b16 %v468
    %v732 = vunpack.c.l.b16 %v469
    %v733 = vunpack.c.l.b16 %v470
    %v734 = vunpack.c.l.b16 %v471
    %v735 = vunpack.c.l.b16 %v472
    %v736 = vunpack.c.l.b16 %v473
    %v737 = vunpack.c.l.b16 %v474
    %v738 = vunpack.c.l.b16 %v475
    %v739 = vunpack.c.l.b16 %v476
    %v740 = vunpack.c.l.b16 %v477
    %v741 = vunpack.c.l.b16 %v478
    %v742 = vunpack.c.l.b16 %v479
    %v743 = vunpack.c.l.b16 %v480
    %v744 = vunpack.c.l.b16 %v481
    %v745 = vunpack.c.l.b16 %v482
    %v746 = vunpack.c.l.b16 %v483
    %v747 = vunpack.c.l.b16 %v484
    %v748 = vunpack.c.l.b16 %v485
    %v749 = vunpack.c.l.b16 %v486
    %v750 = vunpack.c.l.b16 %v487
    %v751 = vunpack.c.l.b16 %v488
    %v752 = vunpack.c.l.b16 %v489
    %v753 = vunpack.c.l.b16 %v490
    %v754 = vunpack.c.l.b16 %v491
    %v755 = vunpack.c.l.b16 %v492
    %v756 = vunpack.c.l.b16 %v493
    %v757 = vunpack.c.l.b16 %v494
    %v758 = vunpack.c.l.b16 %v495
    %v759 = vunpack.c.l.b16 %v496
    %v760 = vunpack.c.l.b16 %v497
    %v761 = vunpack.c.l.b16 %v498
    %v762 = vunpack.c.l.b16 %v499
    %v763 = vunpack.c.l.b16 %v500
    %v764 = vunpack.c.l.b16 %v501
    %v765 = vunpack.c.l.b16 %v502
    %v766 = vunpack.c.l.b16 %v503
    %v767 = vunpack.c.l.b16 %v504
    %v768 = vunpack.c.l.b16 %v505
    %v769 = vunpack.c.l.b16 %v506
    %v770 = vunpack.c.l.b16 %v507
    %v771 = vunpack.c.l.b16 %v508
    %v772 = vunpack.c.l.b16 %v509
    %v773 = vunpack.c.l.b16 %v510
    %v774 = vunpack.c.l.b16 %v511
    %v775 = vunpack.c.l.b16 %v512
    %v776 = vunpack.c.l.b16 %v513
    %v777 = vunpack.c.l.b16 %v514
    %v778 = vunpack.c.l.b16 %v515
    %v779 = vunpack.c.l.b16 %v516
    %v780 = vunpack.c.l.b16 %v517
    %v781 = vunpack.c.l.b16 %v518
    %v782 = vunpack.c.l.b16 %v519
    %v783 = vunpack.c.l.b16 %v520
    %v784 = vunpack.c.l.b16 %v521
    %v785 = vunpack.c.l.b16 %v522
    %v786 = vunpack.c.l.b16 %v523
    %v787 = vunpack.c.l.b16 %v524
    %v788 = vunpack.c.l.b16 %v525
    %v789 = vunpack.c.l.b16 %v526
    %v790 = vunpack.c.l.b16 %v527
    %v791 = vunpack.c.l.b16 %v528
    %v792 = vunpack.c.l.b16 %v529
    %v793 = vunpack.c.l.b16 %v530
    %v794 = vunpack.c.l.b16 %v531
    %v795 = vunpack.c.l.b16 %v532
    %v796 = vunpack.c.l.b16 %v533
    %v797 = vunpack.c.l.b16 %v534
    %v798 = vunpack.c.l.b16 %v535
    %v799 = vunpack.c.l.b16 %v536
    %v800 = vunpack.c.l.b16 %v537
    %v801 = vunpack.c.l.b16 %v538
    %v802 = vunpack.c.l.b16 %v539
    %v803 = vunpack.c.l.b16 %v540
    %v804 = vunpack.c.l.b16 %v541
    %v805 = vunpack.c.l.b16 %v542
    %v806 = vunpack.c.l.b16 %v543
    %v807 = vunpack.c.l.b16 %v544
    %v808 = vunpack.c.l.b16 %v545
    %v809 = vunpack.c.l.b16 %v546
    %v810 = vunpack.c.l.b16 %v547
    %v811 = vunpack.c.l.b16 %v548
    %v812 = vunpack.c.l.b16 %v549
    %v813 = vunpack.c.l.b16 %v550
    %v814 = vunpack.c.l.b16 %v551
    %v815 = vunpack.c.l.b16 %v552
    %v816 = vunpack.c.l.b16 %v553
    %v817 = vunpack.c.l.b16 %v554
    %v818 = vunpack.c.l.b16 %v555
    %v819 = vunpack.c.l.b16 %v556
    %v820 = vunpack.c.l.b16 %v557
    %v821 = vunpack.c.l.b16 %v558
    %v822 = vunpack.c.l.b16 %v559
    %v823 = vunpack.c.l.b16 %v560
    %v824 = vunpack.c.l.b16 %v561
    %v825 = vunpack.c.l.b16 %v562
    %v826 = vunpack.c.l.b16 %v563
    %v827 = vunpack.c.l.b16 %v564
    %v828 = vunpack.c.l.b16 %v565
    %v829 = vunpack.c.l.b16 %v566
    %v830 = vunpack.c.l.b16 %v567
    %v831 = vunpack.c.l.b16 %v568
    %v832 = vunpack.c.l.b16 %v569
    %v833 = vunpack.c.l.b16 %v570
    %v834 = vunpack.c.l.b16 %v571
    %v835 = vunpack.c.l.b16 %v572
    %v836 = vunpack.c.l.b16 %v573
    %v837 = vpack.c.b16 %v710, %v709
    %v838 = vpack.c.b16 %v712, %v711
    %v839 = vpack.c.b16 %v714, %v713
    %v840 = vpack.c.b16 %v716, %v715
    %v841 = vpack.c.b16 %v718, %v717
    %v842 = vpack.c.b16 %v720, %v719
    %v843 = vpack.c.b16 %v722, %v721
    %v844 = vpack.c.b16 %v724, %v723
    %v845 = vpack.c.b16 %v726, %v725
    %v846 = vpack.c.b16 %v728, %v727
    %v847 = vpack.c.b16 %v730, %v729
    %v848 = vpack.c.b16 %v732, %v731
    %v849 = vpack.c.b16 %v734, %v733
    %v850 = vpack.c.b16 %v736, %v735
    %v851 = vpack.c.b16 %v738, %v737
    %v852 = vpack.c.b16 %v740, %v739
    %v853 = vpack.c.b16 %v742, %v741
    %v854 = vpack.c.b16 %v744, %v743
    %v855 = vpack.c.b16 %v746, %v745
    %v856 = vpack.c.b16 %v748, %v747
    %v857 = vpack.c.b16 %v750, %v749
    %v858 = vpack.c.b16 %v752, %v751
    %v859 = vpack.c.b16 %v754, %v753
    %v860 = vpack.c.b16 %v756, %v755
    %v861 = vpack.c.b16 %v758, %v757
    %v862 = vpack.c.b16 %v760, %v759
    %v863 = vpack.c.b16 %v762, %v761
    %v864 = vpack.c.b16 %v764, %v763
    %v865 = vpack.c.b16 %v766, %v765
    %v866 = vpack.c.b16 %v768, %v767
    %v867 = vpack.c.b16 %v770, %v769
    %v868 = vpack.c.b16 %v772, %v771
    %v869 = vpack.c.b16 %v774, %v773
    %v870 = vpack.c.b16 %v776, %v775
    %v871 = vpack.c.b16 %v778, %v777
    %v872 = vpack.c.b16 %v780, %v779
    %v873 = vpack.c.b16 %v782, %v781
    %v874 = vpack.c.b16 %v784, %v783
    %v875 = vpack.c.b16 %v786, %v785
    %v876 = vpack.c.b16 %v788, %v787
    %v877 = vpack.c.b16 %v790, %v789
    %v878 = vpack.c.b16 %v792, %v791
    %v879 = vpack.c.b16 %v794, %v793
    %v880 = vpack.c.b16 %v796, %v795
    %v881 = vpack.c.b16 %v798, %v797
    %v882 = vpack.c.b16 %v800, %v799
    %v883 = vpack.c.b16 %v802, %v801
    %v884 = vpack.c.b16 %v804, %v803
    %v885 = vpack.c.b16 %v806, %v805
    %v886 = vpack.c.b16 %v808, %v807
    %v887 = vpack.c.b16 %v810, %v809
    %v888 = vpack.c.b16 %v812, %v811
    %v889 = vpack.c.b16 %v814, %v813
    %v890 = vpack.c.b16 %v816, %v815
    %v891 = vpack.c.b16 %v818, %v817
    %v892 = vpack.c.b16 %v820, %v819
    %v893 = vpack.c.b16 %v822, %v821
    %v894 = vpack.c.b16 %v824, %v823
    %v895 = vpack.c.b16 %v826, %v825
    %v896 = vpack.c.b16 %v828, %v827
    %v897 = vpack.c.b16 %v830, %v829
    %v898 = vpack.c.b16 %v832, %v831
    %v899 = vpack.c.b16 %v834, %v833
    %v900 = vpack.c.b16 %v836, %v835
    %965 = vmatprep.subr.bf16.mxu0 0
    %966 = vmatpush1.bf16.msra.mxu0 %v844
    %967 = vmatprep.subr.bf16.mxu0 0
    %968 = vmatpush1.bf16.msra.mxu0 %v843
    %969 = vmatprep.subr.bf16.mxu0 0
    %970 = vmatpush1.bf16.msra.mxu0 %v842
    %971 = vmatprep.subr.bf16.mxu0 0
    %972 = vmatpush1.bf16.msra.mxu0 %v841
    %973 = vmatprep.subr.bf16.mxu0 0
    %974 = vmatpush1.bf16.msra.mxu0 %v840
    %975 = vmatprep.subr.bf16.mxu0 0
    %976 = vmatpush1.bf16.msra.mxu0 %v839
    %977 = vmatprep.subr.bf16.mxu0 0
    %978 = vmatpush1.bf16.msra.mxu0 %v838
    %979 = vmatprep.subr.bf16.mxu0 0
    %980 = vmatpush1.bf16.msra.mxu0 %v837
    %981 = vmatprep.subr.bf16.mxu0 0
    %982 = vmatpush2.bf16.msra.mxu0 %v852
    %983 = vmatprep.subr.bf16.mxu0 0
    %984 = vmatpush2.bf16.msra.mxu0 %v851
    %985 = vmatprep.subr.bf16.mxu0 0
    %986 = vmatpush2.bf16.msra.mxu0 %v850
    %987 = vmatprep.subr.bf16.mxu0 0
    %988 = vmatpush2.bf16.msra.mxu0 %v849
    %989 = vmatprep.subr.bf16.mxu0 0
    %990 = vmatpush2.bf16.msra.mxu0 %v848
    %991 = vmatprep.subr.bf16.mxu0 0
    %992 = vmatpush2.bf16.msra.mxu0 %v847
    %993 = vmatprep.subr.bf16.mxu0 0
    %994 = vmatpush2.bf16.msra.mxu0 %v846
    %995 = vmatprep.subr.bf16.mxu0 0
    %996 = vmatpush2.bf16.msra.mxu0 %v845
    %997 = vmatprep.mubr.bf16.mxu0 %v319
    %998 = vmatmul.mubr.bf16.gmra.mxu0 %v318
    %v999 = vpop.f32.mrf.mxu0
    %v1000 = vadd.f32 %v579, %v999
    %v1001 = vpop.f32.mrf.mxu0
    %v1002 = vpop.f32.mrf.mxu0
    %v1003 = vadd.f32 %v579, %v1002
    %v1004 = vpop.f32.mrf.mxu0
    %1005 = vmatprep.mubr.bf16.mxu0 %v327
    %1006 = vmatmul.mubr.bf16.gmra.mxu0 %v326
    %v1007 = vpop.f32.mrf.mxu0
    %v1008 = vadd.f32 %v579, %v1007
    %v1009 = vpop.f32.mrf.mxu0
    %v1010 = vpop.f32.mrf.mxu0
    %v1011 = vadd.f32 %v579, %v1010
    %v1012 = vpop.f32.mrf.mxu0
    %1013 = vmatprep.mubr.bf16.mxu0 %v335
    %1014 = vmatmul.mubr.bf16.gmra.mxu0 %v334
    %v1015 = vpop.f32.mrf.mxu0
    %v1016 = vadd.f32 %v579, %v1015
    %v1017 = vpop.f32.mrf.mxu0
    %v1018 = vpop.f32.mrf.mxu0
    %v1019 = vadd.f32 %v579, %v1018
    %v1020 = vpop.f32.mrf.mxu0
    %1021 = vmatprep.mubr.bf16.mxu0 %v343
    %1022 = vmatmul.mubr.bf16.gmra.mxu0 %v342
    %v1023 = vpop.f32.mrf.mxu0
    %v1024 = vadd.f32 %v579, %v1023
    %v1025 = vpop.f32.mrf.mxu0
    %v1026 = vpop.f32.mrf.mxu0
    %v1027 = vadd.f32 %v579, %v1026
    %v1028 = vpop.f32.mrf.mxu0
    %1029 = vmatprep.mubr.bf16.mxu0 %v351
    %1030 = vmatmul.mubr.bf16.gmra.mxu0 %v350
    %v1031 = vpop.f32.mrf.mxu0
    %v1032 = vadd.f32 %v579, %v1031
    %v1033 = vpop.f32.mrf.mxu0
    %v1034 = vpop.f32.mrf.mxu0
    %v1035 = vadd.f32 %v579, %v1034
    %v1036 = vpop.f32.mrf.mxu0
    %1037 = vmatprep.mubr.bf16.mxu0 %v359
    %1038 = vmatmul.mubr.bf16.gmra.mxu0 %v358
    %v1039 = vpop.f32.mrf.mxu0
    %v1040 = vadd.f32 %v579, %v1039
    %v1041 = vpop.f32.mrf.mxu0
    %v1042 = vpop.f32.mrf.mxu0
    %v1043 = vadd.f32 %v579, %v1042
    %v1044 = vpop.f32.mrf.mxu0
    %1045 = vmatprep.mubr.bf16.mxu0 %v367
    %1046 = vmatmul.mubr.bf16.gmra.mxu0 %v366
    %v1047 = vpop.f32.mrf.mxu0
    %v1048 = vadd.f32 %v579, %v1047
    %v1049 = vpop.f32.mrf.mxu0
    %v1050 = vpop.f32.mrf.mxu0
    %v1051 = vadd.f32 %v579, %v1050
    %v1052 = vpop.f32.mrf.mxu0
    %1053 = vmatprep.mubr.bf16.mxu0 %v375
    %1054 = vmatmul.mubr.bf16.gmra.mxu0 %v374
    %v1055 = vpop.f32.mrf.mxu0
    %v1056 = vadd.f32 %v579, %v1055
    %v1057 = vpop.f32.mrf.mxu0
    %v1058 = vpop.f32.mrf.mxu0
    %v1059 = vadd.f32 %v579, %v1058
    %v1060 = vpop.f32.mrf.mxu0
    %1061 = vmatprep.mubr.bf16.mxu0 %v383
    %1062 = vmatmul.mubr.bf16.gmra.mxu0 %v382
    %v1063 = vpop.f32.mrf.mxu0
    %v1064 = vadd.f32 %v579, %v1063
    %v1065 = vpop.f32.mrf.mxu0
    %v1066 = vpop.f32.mrf.mxu0
    %v1067 = vadd.f32 %v579, %v1066
    %v1068 = vpop.f32.mrf.mxu0
    %1069 = vmatprep.mubr.bf16.mxu0 %v391
    %1070 = vmatmul.mubr.bf16.gmra.mxu0 %v390
    %v1071 = vpop.f32.mrf.mxu0
    %v1072 = vadd.f32 %v579, %v1071
    %v1073 = vpop.f32.mrf.mxu0
    %v1074 = vpop.f32.mrf.mxu0
    %v1075 = vadd.f32 %v579, %v1074
    %v1076 = vpop.f32.mrf.mxu0
    %1077 = vmatprep.mubr.bf16.mxu0 %v399
    %1078 = vmatmul.mubr.bf16.gmra.mxu0 %v398
    %v1079 = vpop.f32.mrf.mxu0
    %v1080 = vadd.f32 %v579, %v1079
    %v1081 = vpop.f32.mrf.mxu0
    %v1082 = vpop.f32.mrf.mxu0
    %v1083 = vadd.f32 %v579, %v1082
    %v1084 = vpop.f32.mrf.mxu0
    %1085 = vmatprep.mubr.bf16.mxu0 %v407
    %1086 = vmatmul.mubr.bf16.gmra.mxu0 %v406
    %v1087 = vpop.f32.mrf.mxu0
    %v1088 = vadd.f32 %v579, %v1087
    %v1089 = vpop.f32.mrf.mxu0
    %v1090 = vpop.f32.mrf.mxu0
    %v1091 = vadd.f32 %v579, %v1090
    %v1092 = vpop.f32.mrf.mxu0
    %1093 = vmatprep.mubr.bf16.mxu0 %v415
    %1094 = vmatmul.mubr.bf16.gmra.mxu0 %v414
    %v1095 = vpop.f32.mrf.mxu0
    %v1096 = vadd.f32 %v579, %v1095
    %v1097 = vpop.f32.mrf.mxu0
    %v1098 = vpop.f32.mrf.mxu0
    %v1099 = vadd.f32 %v579, %v1098
    %v1100 = vpop.f32.mrf.mxu0
    %1101 = vmatprep.mubr.bf16.mxu0 %v423
    %1102 = vmatmul.mubr.bf16.gmra.mxu0 %v422
    %v1103 = vpop.f32.mrf.mxu0
    %v1104 = vadd.f32 %v579, %v1103
    %v1105 = vpop.f32.mrf.mxu0
    %v1106 = vpop.f32.mrf.mxu0
    %v1107 = vadd.f32 %v579, %v1106
    %v1108 = vpop.f32.mrf.mxu0
    %1109 = vmatprep.mubr.bf16.mxu0 %v431
    %1110 = vmatmul.mubr.bf16.gmra.mxu0 %v430
    %v1111 = vpop.f32.mrf.mxu0
    %v1112 = vadd.f32 %v579, %v1111
    %v1113 = vpop.f32.mrf.mxu0
    %v1114 = vpop.f32.mrf.mxu0
    %v1115 = vadd.f32 %v579, %v1114
    %v1116 = vpop.f32.mrf.mxu0
    %1117 = vmatprep.mubr.bf16.mxu0 %v439
    %1118 = vmatmul.mubr.bf16.gmra.mxu0 %v438
    %v1119 = vpop.f32.mrf.mxu0
    %v1120 = vadd.f32 %v579, %v1119
    %v1121 = vpop.f32.mrf.mxu0
    %v1122 = vpop.f32.mrf.mxu0
    %v1123 = vadd.f32 %v579, %v1122
    %v1124 = vpop.f32.mrf.mxu0
    %1125 = vdwg.mxu0
    %1126 = vmatprep.subr.bf16.mxu0 0
    %1127 = vmatpush1.bf16.msra.mxu0 %v860
    %1128 = vmatprep.subr.bf16.mxu0 0
    %1129 = vmatpush1.bf16.msra.mxu0 %v859
    %1130 = vmatprep.subr.bf16.mxu0 0
    %1131 = vmatpush1.bf16.msra.mxu0 %v858
    %1132 = vmatprep.subr.bf16.mxu0 0
    %1133 = vmatpush1.bf16.msra.mxu0 %v857
    %1134 = vmatprep.subr.bf16.mxu0 0
    %1135 = vmatpush1.bf16.msra.mxu0 %v856
    %1136 = vmatprep.subr.bf16.mxu0 0
    %1137 = vmatpush1.bf16.msra.mxu0 %v855
    %1138 = vmatprep.subr.bf16.mxu0 0
    %1139 = vmatpush1.bf16.msra.mxu0 %v854
    %1140 = vmatprep.subr.bf16.mxu0 0
    %1141 = vmatpush1.bf16.msra.mxu0 %v853
    %1142 = vmatprep.subr.bf16.mxu0 0
    %1143 = vmatpush2.bf16.msra.mxu0 %v868
    %1144 = vmatprep.subr.bf16.mxu0 0
    %1145 = vmatpush2.bf16.msra.mxu0 %v867
    %1146 = vmatprep.subr.bf16.mxu0 0
    %1147 = vmatpush2.bf16.msra.mxu0 %v866
    %1148 = vmatprep.subr.bf16.mxu0 0
    %1149 = vmatpush2.bf16.msra.mxu0 %v865
    %1150 = vmatprep.subr.bf16.mxu0 0
    %1151 = vmatpush2.bf16.msra.mxu0 %v864
    %1152 = vmatprep.subr.bf16.mxu0 0
    %1153 = vmatpush2.bf16.msra.mxu0 %v863
    %1154 = vmatprep.subr.bf16.mxu0 0
    %1155 = vmatpush2.bf16.msra.mxu0 %v862
    %1156 = vmatprep.subr.bf16.mxu0 0
    %1157 = vmatpush2.bf16.msra.mxu0 %v861
    %1158 = vmatprep.mubr.bf16.mxu0 %v321
    %1159 = vmatmul.mubr.bf16.gmra.mxu0 %v320
    %v1160 = vpop.f32.mrf.mxu0
    %v1161 = vadd.f32 %v1000, %v1160
    %v1162 = vpop.f32.mrf.mxu0
    %v1163 = vpop.f32.mrf.mxu0
    %v1164 = vadd.f32 %v1003, %v1163
    %v1165 = vpop.f32.mrf.mxu0
    %1166 = vmatprep.mubr.bf16.mxu0 %v329
    %1167 = vmatmul.mubr.bf16.gmra.mxu0 %v328
    %v1168 = vpop.f32.mrf.mxu0
    %v1169 = vadd.f32 %v1008, %v1168
    %v1170 = vpop.f32.mrf.mxu0
    %v1171 = vpop.f32.mrf.mxu0
    %v1172 = vadd.f32 %v1011, %v1171
    %v1173 = vpop.f32.mrf.mxu0
    %1174 = vmatprep.mubr.bf16.mxu0 %v337
    %1175 = vmatmul.mubr.bf16.gmra.mxu0 %v336
    %v1176 = vpop.f32.mrf.mxu0
    %v1177 = vadd.f32 %v1016, %v1176
    %v1178 = vpop.f32.mrf.mxu0
    %v1179 = vpop.f32.mrf.mxu0
    %v1180 = vadd.f32 %v1019, %v1179
    %v1181 = vpop.f32.mrf.mxu0
    %1182 = vmatprep.mubr.bf16.mxu0 %v345
    %1183 = vmatmul.mubr.bf16.gmra.mxu0 %v344
    %v1184 = vpop.f32.mrf.mxu0
    %v1185 = vadd.f32 %v1024, %v1184
    %v1186 = vpop.f32.mrf.mxu0
    %v1187 = vpop.f32.mrf.mxu0
    %v1188 = vadd.f32 %v1027, %v1187
    %v1189 = vpop.f32.mrf.mxu0
    %1190 = vmatprep.mubr.bf16.mxu0 %v353
    %1191 = vmatmul.mubr.bf16.gmra.mxu0 %v352
    %v1192 = vpop.f32.mrf.mxu0
    %v1193 = vadd.f32 %v1032, %v1192
    %v1194 = vpop.f32.mrf.mxu0
    %v1195 = vpop.f32.mrf.mxu0
    %v1196 = vadd.f32 %v1035, %v1195
    %v1197 = vpop.f32.mrf.mxu0
    %1198 = vmatprep.mubr.bf16.mxu0 %v361
    %1199 = vmatmul.mubr.bf16.gmra.mxu0 %v360
    %v1200 = vpop.f32.mrf.mxu0
    %v1201 = vadd.f32 %v1040, %v1200
    %v1202 = vpop.f32.mrf.mxu0
    %v1203 = vpop.f32.mrf.mxu0
    %v1204 = vadd.f32 %v1043, %v1203
    %v1205 = vpop.f32.mrf.mxu0
    %1206 = vmatprep.mubr.bf16.mxu0 %v369
    %1207 = vmatmul.mubr.bf16.gmra.mxu0 %v368
    %v1208 = vpop.f32.mrf.mxu0
    %v1209 = vadd.f32 %v1048, %v1208
    %v1210 = vpop.f32.mrf.mxu0
    %v1211 = vpop.f32.mrf.mxu0
    %v1212 = vadd.f32 %v1051, %v1211
    %v1213 = vpop.f32.mrf.mxu0
    %1214 = vmatprep.mubr.bf16.mxu0 %v377
    %1215 = vmatmul.mubr.bf16.gmra.mxu0 %v376
    %v1216 = vpop.f32.mrf.mxu0
    %v1217 = vadd.f32 %v1056, %v1216
    %v1218 = vpop.f32.mrf.mxu0
    %v1219 = vpop.f32.mrf.mxu0
    %v1220 = vadd.f32 %v1059, %v1219
    %v1221 = vpop.f32.mrf.mxu0
    %1222 = vmatprep.mubr.bf16.mxu0 %v385
    %1223 = vmatmul.mubr.bf16.gmra.mxu0 %v384
    %v1224 = vpop.f32.mrf.mxu0
    %v1225 = vadd.f32 %v1064, %v1224
    %v1226 = vpop.f32.mrf.mxu0
    %v1227 = vpop.f32.mrf.mxu0
    %v1228 = vadd.f32 %v1067, %v1227
    %v1229 = vpop.f32.mrf.mxu0
    %1230 = vmatprep.mubr.bf16.mxu0 %v393
    %1231 = vmatmul.mubr.bf16.gmra.mxu0 %v392
    %v1232 = vpop.f32.mrf.mxu0
    %v1233 = vadd.f32 %v1072, %v1232
    %v1234 = vpop.f32.mrf.mxu0
    %v1235 = vpop.f32.mrf.mxu0
    %v1236 = vadd.f32 %v1075, %v1235
    %v1237 = vpop.f32.mrf.mxu0
    %1238 = vmatprep.mubr.bf16.mxu0 %v401
    %1239 = vmatmul.mubr.bf16.gmra.mxu0 %v400
    %v1240 = vpop.f32.mrf.mxu0
    %v1241 = vadd.f32 %v1080, %v1240
    %v1242 = vpop.f32.mrf.mxu0
    %v1243 = vpop.f32.mrf.mxu0
    %v1244 = vadd.f32 %v1083, %v1243
    %v1245 = vpop.f32.mrf.mxu0
    %1246 = vmatprep.mubr.bf16.mxu0 %v409
    %1247 = vmatmul.mubr.bf16.gmra.mxu0 %v408
    %v1248 = vpop.f32.mrf.mxu0
    %v1249 = vadd.f32 %v1088, %v1248
    %v1250 = vpop.f32.mrf.mxu0
    %v1251 = vpop.f32.mrf.mxu0
    %v1252 = vadd.f32 %v1091, %v1251
    %v1253 = vpop.f32.mrf.mxu0
    %1254 = vmatprep.mubr.bf16.mxu0 %v417
    %1255 = vmatmul.mubr.bf16.gmra.mxu0 %v416
    %v1256 = vpop.f32.mrf.mxu0
    %v1257 = vadd.f32 %v1096, %v1256
    %v1258 = vpop.f32.mrf.mxu0
    %v1259 = vpop.f32.mrf.mxu0
    %v1260 = vadd.f32 %v1099, %v1259
    %v1261 = vpop.f32.mrf.mxu0
    %1262 = vmatprep.mubr.bf16.mxu0 %v425
    %1263 = vmatmul.mubr.bf16.gmra.mxu0 %v424
    %v1264 = vpop.f32.mrf.mxu0
    %v1265 = vadd.f32 %v1104, %v1264
    %v1266 = vpop.f32.mrf.mxu0
    %v1267 = vpop.f32.mrf.mxu0
    %v1268 = vadd.f32 %v1107, %v1267
    %v1269 = vpop.f32.mrf.mxu0
    %1270 = vmatprep.mubr.bf16.mxu0 %v433
    %1271 = vmatmul.mubr.bf16.gmra.mxu0 %v432
    %v1272 = vpop.f32.mrf.mxu0
    %v1273 = vadd.f32 %v1112, %v1272
    %v1274 = vpop.f32.mrf.mxu0
    %v1275 = vpop.f32.mrf.mxu0
    %v1276 = vadd.f32 %v1115, %v1275
    %v1277 = vpop.f32.mrf.mxu0
    %1278 = vmatprep.mubr.bf16.mxu0 %v441
    %1279 = vmatmul.mubr.bf16.gmra.mxu0 %v440
    %v1280 = vpop.f32.mrf.mxu0
    %v1281 = vadd.f32 %v1120, %v1280
    %v1282 = vpop.f32.mrf.mxu0
    %v1283 = vpop.f32.mrf.mxu0
    %v1284 = vadd.f32 %v1123, %v1283
    %v1285 = vpop.f32.mrf.mxu0
    %1286 = vdwg.mxu0
    %1287 = vmatprep.subr.bf16.mxu0 0
    %1288 = vmatpush1.bf16.msra.mxu0 %v876
    %1289 = vmatprep.subr.bf16.mxu0 0
    %1290 = vmatpush1.bf16.msra.mxu0 %v875
    %1291 = vmatprep.subr.bf16.mxu0 0
    %1292 = vmatpush1.bf16.msra.mxu0 %v874
    %1293 = vmatprep.subr.bf16.mxu0 0
    %1294 = vmatpush1.bf16.msra.mxu0 %v873
    %1295 = vmatprep.subr.bf16.mxu0 0
    %1296 = vmatpush1.bf16.msra.mxu0 %v872
    %1297 = vmatprep.subr.bf16.mxu0 0
    %1298 = vmatpush1.bf16.msra.mxu0 %v871
    %1299 = vmatprep.subr.bf16.mxu0 0
    %1300 = vmatpush1.bf16.msra.mxu0 %v870
    %1301 = vmatprep.subr.bf16.mxu0 0
    %1302 = vmatpush1.bf16.msra.mxu0 %v869
    %1303 = vmatprep.subr.bf16.mxu0 0
    %1304 = vmatpush2.bf16.msra.mxu0 %v884
    %1305 = vmatprep.subr.bf16.mxu0 0
    %1306 = vmatpush2.bf16.msra.mxu0 %v883
    %1307 = vmatprep.subr.bf16.mxu0 0
    %1308 = vmatpush2.bf16.msra.mxu0 %v882
    %1309 = vmatprep.subr.bf16.mxu0 0
    %1310 = vmatpush2.bf16.msra.mxu0 %v881
    %1311 = vmatprep.subr.bf16.mxu0 0
    %1312 = vmatpush2.bf16.msra.mxu0 %v880
    %1313 = vmatprep.subr.bf16.mxu0 0
    %1314 = vmatpush2.bf16.msra.mxu0 %v879
    %1315 = vmatprep.subr.bf16.mxu0 0
    %1316 = vmatpush2.bf16.msra.mxu0 %v878
    %1317 = vmatprep.subr.bf16.mxu0 0
    %1318 = vmatpush2.bf16.msra.mxu0 %v877
    %1319 = vmatprep.mubr.bf16.mxu0 %v323
    %1320 = vmatmul.mubr.bf16.gmra.mxu0 %v322
    %v1321 = vpop.f32.mrf.mxu0
    %v1322 = vadd.f32 %v1161, %v1321
    %v1323 = vpop.f32.mrf.mxu0
    %v1324 = vpop.f32.mrf.mxu0
    %v1325 = vadd.f32 %v1164, %v1324
    %v1326 = vpop.f32.mrf.mxu0
    %1327 = vmatprep.mubr.bf16.mxu0 %v331
    %1328 = vmatmul.mubr.bf16.gmra.mxu0 %v330
    %v1329 = vpop.f32.mrf.mxu0
    %v1330 = vadd.f32 %v1169, %v1329
    %v1331 = vpop.f32.mrf.mxu0
    %v1332 = vpop.f32.mrf.mxu0
    %v1333 = vadd.f32 %v1172, %v1332
    %v1334 = vpop.f32.mrf.mxu0
    %1335 = vmatprep.mubr.bf16.mxu0 %v339
    %1336 = vmatmul.mubr.bf16.gmra.mxu0 %v338
    %v1337 = vpop.f32.mrf.mxu0
    %v1338 = vadd.f32 %v1177, %v1337
    %v1339 = vpop.f32.mrf.mxu0
    %v1340 = vpop.f32.mrf.mxu0
    %v1341 = vadd.f32 %v1180, %v1340
    %v1342 = vpop.f32.mrf.mxu0
    %1343 = vmatprep.mubr.bf16.mxu0 %v347
    %1344 = vmatmul.mubr.bf16.gmra.mxu0 %v346
    %v1345 = vpop.f32.mrf.mxu0
    %v1346 = vadd.f32 %v1185, %v1345
    %v1347 = vpop.f32.mrf.mxu0
    %v1348 = vpop.f32.mrf.mxu0
    %v1349 = vadd.f32 %v1188, %v1348
    %v1350 = vpop.f32.mrf.mxu0
    %1351 = vmatprep.mubr.bf16.mxu0 %v355
    %1352 = vmatmul.mubr.bf16.gmra.mxu0 %v354
    %v1353 = vpop.f32.mrf.mxu0
    %v1354 = vadd.f32 %v1193, %v1353
    %v1355 = vpop.f32.mrf.mxu0
    %v1356 = vpop.f32.mrf.mxu0
    %v1357 = vadd.f32 %v1196, %v1356
    %v1358 = vpop.f32.mrf.mxu0
    %1359 = vmatprep.mubr.bf16.mxu0 %v363
    %1360 = vmatmul.mubr.bf16.gmra.mxu0 %v362
    %v1361 = vpop.f32.mrf.mxu0
    %v1362 = vadd.f32 %v1201, %v1361
    %v1363 = vpop.f32.mrf.mxu0
    %v1364 = vpop.f32.mrf.mxu0
    %v1365 = vadd.f32 %v1204, %v1364
    %v1366 = vpop.f32.mrf.mxu0
    %1367 = vmatprep.mubr.bf16.mxu0 %v371
    %1368 = vmatmul.mubr.bf16.gmra.mxu0 %v370
    %v1369 = vpop.f32.mrf.mxu0
    %v1370 = vadd.f32 %v1209, %v1369
    %v1371 = vpop.f32.mrf.mxu0
    %v1372 = vpop.f32.mrf.mxu0
    %v1373 = vadd.f32 %v1212, %v1372
    %v1374 = vpop.f32.mrf.mxu0
    %1375 = vmatprep.mubr.bf16.mxu0 %v379
    %1376 = vmatmul.mubr.bf16.gmra.mxu0 %v378
    %v1377 = vpop.f32.mrf.mxu0
    %v1378 = vadd.f32 %v1217, %v1377
    %v1379 = vpop.f32.mrf.mxu0
    %v1380 = vpop.f32.mrf.mxu0
    %v1381 = vadd.f32 %v1220, %v1380
    %v1382 = vpop.f32.mrf.mxu0
    %1383 = vmatprep.mubr.bf16.mxu0 %v387
    %1384 = vmatmul.mubr.bf16.gmra.mxu0 %v386
    %v1385 = vpop.f32.mrf.mxu0
    %v1386 = vadd.f32 %v1225, %v1385
    %v1387 = vpop.f32.mrf.mxu0
    %v1388 = vpop.f32.mrf.mxu0
    %v1389 = vadd.f32 %v1228, %v1388
    %v1390 = vpop.f32.mrf.mxu0
    %1391 = vmatprep.mubr.bf16.mxu0 %v395
    %1392 = vmatmul.mubr.bf16.gmra.mxu0 %v394
    %v1393 = vpop.f32.mrf.mxu0
    %v1394 = vadd.f32 %v1233, %v1393
    %v1395 = vpop.f32.mrf.mxu0
    %v1396 = vpop.f32.mrf.mxu0
    %v1397 = vadd.f32 %v1236, %v1396
    %v1398 = vpop.f32.mrf.mxu0
    %1399 = vmatprep.mubr.bf16.mxu0 %v403
    %1400 = vmatmul.mubr.bf16.gmra.mxu0 %v402
    %v1401 = vpop.f32.mrf.mxu0
    %v1402 = vadd.f32 %v1241, %v1401
    %v1403 = vpop.f32.mrf.mxu0
    %v1404 = vpop.f32.mrf.mxu0
    %v1405 = vadd.f32 %v1244, %v1404
    %v1406 = vpop.f32.mrf.mxu0
    %1407 = vmatprep.mubr.bf16.mxu0 %v411
    %1408 = vmatmul.mubr.bf16.gmra.mxu0 %v410
    %v1409 = vpop.f32.mrf.mxu0
    %v1410 = vadd.f32 %v1249, %v1409
    %v1411 = vpop.f32.mrf.mxu0
    %v1412 = vpop.f32.mrf.mxu0
    %v1413 = vadd.f32 %v1252, %v1412
    %v1414 = vpop.f32.mrf.mxu0
    %1415 = vmatprep.mubr.bf16.mxu0 %v419
    %1416 = vmatmul.mubr.bf16.gmra.mxu0 %v418
    %v1417 = vpop.f32.mrf.mxu0
    %v1418 = vadd.f32 %v1257, %v1417
    %v1419 = vpop.f32.mrf.mxu0
    %v1420 = vpop.f32.mrf.mxu0
    %v1421 = vadd.f32 %v1260, %v1420
    %v1422 = vpop.f32.mrf.mxu0
    %1423 = vmatprep.mubr.bf16.mxu0 %v427
    %1424 = vmatmul.mubr.bf16.gmra.mxu0 %v426
    %v1425 = vpop.f32.mrf.mxu0
    %v1426 = vadd.f32 %v1265, %v1425
    %v1427 = vpop.f32.mrf.mxu0
    %v1428 = vpop.f32.mrf.mxu0
    %v1429 = vadd.f32 %v1268, %v1428
    %v1430 = vpop.f32.mrf.mxu0
    %1431 = vmatprep.mubr.bf16.mxu0 %v435
    %1432 = vmatmul.mubr.bf16.gmra.mxu0 %v434
    %v1433 = vpop.f32.mrf.mxu0
    %v1434 = vadd.f32 %v1273, %v1433
    %v1435 = vpop.f32.mrf.mxu0
    %v1436 = vpop.f32.mrf.mxu0
    %v1437 = vadd.f32 %v1276, %v1436
    %v1438 = vpop.f32.mrf.mxu0
    %1439 = vmatprep.mubr.bf16.mxu0 %v443
    %1440 = vmatmul.mubr.bf16.gmra.mxu0 %v442
    %v1441 = vpop.f32.mrf.mxu0
    %v1442 = vadd.f32 %v1281, %v1441
    %v1443 = vpop.f32.mrf.mxu0
    %v1444 = vpop.f32.mrf.mxu0
    %v1445 = vadd.f32 %v1284, %v1444
    %v1446 = vpop.f32.mrf.mxu0
    %1447 = vdwg.mxu0
    %1448 = vmatprep.subr.bf16.mxu0 0
    %1449 = vmatpush1.bf16.msra.mxu0 %v892
    %1450 = vmatprep.subr.bf16.mxu0 0
    %1451 = vmatpush1.bf16.msra.mxu0 %v891
    %1452 = vmatprep.subr.bf16.mxu0 0
    %1453 = vmatpush1.bf16.msra.mxu0 %v890
    %1454 = vmatprep.subr.bf16.mxu0 0
    %1455 = vmatpush1.bf16.msra.mxu0 %v889
    %1456 = vmatprep.subr.bf16.mxu0 0
    %1457 = vmatpush1.bf16.msra.mxu0 %v888
    %1458 = vmatprep.subr.bf16.mxu0 0
    %1459 = vmatpush1.bf16.msra.mxu0 %v887
    %1460 = vmatprep.subr.bf16.mxu0 0
    %1461 = vmatpush1.bf16.msra.mxu0 %v886
    %1462 = vmatprep.subr.bf16.mxu0 0
    %1463 = vmatpush1.bf16.msra.mxu0 %v885
    %1464 = vmatprep.subr.bf16.mxu0 0
    %1465 = vmatpush2.bf16.msra.mxu0 %v900
    %1466 = vmatprep.subr.bf16.mxu0 0
    %1467 = vmatpush2.bf16.msra.mxu0 %v899
    %1468 = vmatprep.subr.bf16.mxu0 0
    %1469 = vmatpush2.bf16.msra.mxu0 %v898
    %1470 = vmatprep.subr.bf16.mxu0 0
    %1471 = vmatpush2.bf16.msra.mxu0 %v897
    %1472 = vmatprep.subr.bf16.mxu0 0
    %1473 = vmatpush2.bf16.msra.mxu0 %v896
    %1474 = vmatprep.subr.bf16.mxu0 0
    %1475 = vmatpush2.bf16.msra.mxu0 %v895
    %1476 = vmatprep.subr.bf16.mxu0 0
    %1477 = vmatpush2.bf16.msra.mxu0 %v894
    %1478 = vmatprep.subr.bf16.mxu0 0
    %1479 = vmatpush2.bf16.msra.mxu0 %v893
    %1480 = vmatprep.mubr.bf16.mxu0 %v325
    %1481 = vmatmul.mubr.bf16.gmra.mxu0 %v324
    %v1482 = vpop.f32.mrf.mxu0
    %v1483 = vadd.f32 %v1322, %v1482
    %v1484 = vpop.f32.mrf.mxu0
    %v1485 = vpop.f32.mrf.mxu0
    %v1486 = vadd.f32 %v1325, %v1485
    %v1487 = vpop.f32.mrf.mxu0
    %1488 = vmatprep.mubr.bf16.mxu0 %v333
    %1489 = vmatmul.mubr.bf16.gmra.mxu0 %v332
    %v1490 = vpop.f32.mrf.mxu0
    %v1491 = vadd.f32 %v1330, %v1490
    %v1492 = vpop.f32.mrf.mxu0
    %v1493 = vpop.f32.mrf.mxu0
    %v1494 = vadd.f32 %v1333, %v1493
    %v1495 = vpop.f32.mrf.mxu0
    %1496 = vmatprep.mubr.bf16.mxu0 %v341
    %1497 = vmatmul.mubr.bf16.gmra.mxu0 %v340
    %v1498 = vpop.f32.mrf.mxu0
    %v1499 = vadd.f32 %v1338, %v1498
    %v1500 = vpop.f32.mrf.mxu0
    %v1501 = vpop.f32.mrf.mxu0
    %v1502 = vadd.f32 %v1341, %v1501
    %v1503 = vpop.f32.mrf.mxu0
    %1504 = vmatprep.mubr.bf16.mxu0 %v349
    %1505 = vmatmul.mubr.bf16.gmra.mxu0 %v348
    %v1506 = vpop.f32.mrf.mxu0
    %v1507 = vadd.f32 %v1346, %v1506
    %v1508 = vpop.f32.mrf.mxu0
    %v1509 = vpop.f32.mrf.mxu0
    %v1510 = vadd.f32 %v1349, %v1509
    %v1511 = vpop.f32.mrf.mxu0
    %1512 = vmatprep.mubr.bf16.mxu0 %v357
    %1513 = vmatmul.mubr.bf16.gmra.mxu0 %v356
    %v1514 = vpop.f32.mrf.mxu0
    %v1515 = vadd.f32 %v1354, %v1514
    %v1516 = vpop.f32.mrf.mxu0
    %v1517 = vpop.f32.mrf.mxu0
    %v1518 = vadd.f32 %v1357, %v1517
    %v1519 = vpop.f32.mrf.mxu0
    %1520 = vmatprep.mubr.bf16.mxu0 %v365
    %1521 = vmatmul.mubr.bf16.gmra.mxu0 %v364
    %v1522 = vpop.f32.mrf.mxu0
    %v1523 = vadd.f32 %v1362, %v1522
    %v1524 = vpop.f32.mrf.mxu0
    %v1525 = vpop.f32.mrf.mxu0
    %v1526 = vadd.f32 %v1365, %v1525
    %v1527 = vpop.f32.mrf.mxu0
    %1528 = vmatprep.mubr.bf16.mxu0 %v373
    %1529 = vmatmul.mubr.bf16.gmra.mxu0 %v372
    %v1530 = vpop.f32.mrf.mxu0
    %v1531 = vadd.f32 %v1370, %v1530
    %v1532 = vpop.f32.mrf.mxu0
    %v1533 = vpop.f32.mrf.mxu0
    %v1534 = vadd.f32 %v1373, %v1533
    %v1535 = vpop.f32.mrf.mxu0
    %1536 = vmatprep.mubr.bf16.mxu0 %v381
    %1537 = vmatmul.mubr.bf16.gmra.mxu0 %v380
    %v1538 = vpop.f32.mrf.mxu0
    %v1539 = vadd.f32 %v1378, %v1538
    %v1540 = vpop.f32.mrf.mxu0
    %v1541 = vpop.f32.mrf.mxu0
    %v1542 = vadd.f32 %v1381, %v1541
    %v1543 = vpop.f32.mrf.mxu0
    %1544 = vmatprep.mubr.bf16.mxu0 %v389
    %1545 = vmatmul.mubr.bf16.gmra.mxu0 %v388
    %v1546 = vpop.f32.mrf.mxu0
    %v1547 = vadd.f32 %v1386, %v1546
    %v1548 = vpop.f32.mrf.mxu0
    %v1549 = vpop.f32.mrf.mxu0
    %v1550 = vadd.f32 %v1389, %v1549
    %v1551 = vpop.f32.mrf.mxu0
    %1552 = vmatprep.mubr.bf16.mxu0 %v397
    %1553 = vmatmul.mubr.bf16.gmra.mxu0 %v396
    %v1554 = vpop.f32.mrf.mxu0
    %v1555 = vadd.f32 %v1394, %v1554
    %v1556 = vpop.f32.mrf.mxu0
    %v1557 = vpop.f32.mrf.mxu0
    %v1558 = vadd.f32 %v1397, %v1557
    %v1559 = vpop.f32.mrf.mxu0
    %1560 = vmatprep.mubr.bf16.mxu0 %v405
    %1561 = vmatmul.mubr.bf16.gmra.mxu0 %v404
    %v1562 = vpop.f32.mrf.mxu0
    %v1563 = vadd.f32 %v1402, %v1562
    %v1564 = vpop.f32.mrf.mxu0
    %v1565 = vpop.f32.mrf.mxu0
    %v1566 = vadd.f32 %v1405, %v1565
    %v1567 = vpop.f32.mrf.mxu0
    %1568 = vmatprep.mubr.bf16.mxu0 %v413
    %1569 = vmatmul.mubr.bf16.gmra.mxu0 %v412
    %v1570 = vpop.f32.mrf.mxu0
    %v1571 = vadd.f32 %v1410, %v1570
    %v1572 = vpop.f32.mrf.mxu0
    %v1573 = vpop.f32.mrf.mxu0
    %v1574 = vadd.f32 %v1413, %v1573
    %v1575 = vpop.f32.mrf.mxu0
    %1576 = vmatprep.mubr.bf16.mxu0 %v421
    %1577 = vmatmul.mubr.bf16.gmra.mxu0 %v420
    %v1578 = vpop.f32.mrf.mxu0
    %v1579 = vadd.f32 %v1418, %v1578
    %v1580 = vpop.f32.mrf.mxu0
    %v1581 = vpop.f32.mrf.mxu0
    %v1582 = vadd.f32 %v1421, %v1581
    %v1583 = vpop.f32.mrf.mxu0
    %1584 = vmatprep.mubr.bf16.mxu0 %v429
    %1585 = vmatmul.mubr.bf16.gmra.mxu0 %v428
    %v1586 = vpop.f32.mrf.mxu0
    %v1587 = vadd.f32 %v1426, %v1586
    %v1588 = vpop.f32.mrf.mxu0
    %v1589 = vpop.f32.mrf.mxu0
    %v1590 = vadd.f32 %v1429, %v1589
    %v1591 = vpop.f32.mrf.mxu0
    %1592 = vmatprep.mubr.bf16.mxu0 %v437
    %1593 = vmatmul.mubr.bf16.gmra.mxu0 %v436
    %v1594 = vpop.f32.mrf.mxu0
    %v1595 = vadd.f32 %v1434, %v1594
    %v1596 = vpop.f32.mrf.mxu0
    %v1597 = vpop.f32.mrf.mxu0
    %v1598 = vadd.f32 %v1437, %v1597
    %v1599 = vpop.f32.mrf.mxu0
    %1600 = vmatprep.mubr.bf16.mxu0 %v445
    %1601 = vmatmul.mubr.bf16.gmra.mxu0 %v444
    %v1602 = vpop.f32.mrf.mxu0
    %v1603 = vadd.f32 %v1442, %v1602
    %v1604 = vpop.f32.mrf.mxu0
    %v1605 = vpop.f32.mrf.mxu0
    %v1606 = vadd.f32 %v1445, %v1605
    %v1607 = vpop.f32.mrf.mxu0
    %1608 = vdwg.mxu0
    %v1609 = vmax.f32 %v1483, 0.0
    %v1610 = vmax.f32 %v1486, 0.0
    %v1611 = vmax.f32 %v1491, 0.0
    %v1612 = vmax.f32 %v1494, 0.0
    %v1613 = vmax.f32 %v1499, 0.0
    %v1614 = vmax.f32 %v1502, 0.0
    %v1615 = vmax.f32 %v1507, 0.0
    %v1616 = vmax.f32 %v1510, 0.0
    %v1617 = vmax.f32 %v1515, 0.0
    %v1618 = vmax.f32 %v1518, 0.0
    %v1619 = vmax.f32 %v1523, 0.0
    %v1620 = vmax.f32 %v1526, 0.0
    %v1621 = vmax.f32 %v1531, 0.0
    %v1622 = vmax.f32 %v1534, 0.0
    %v1623 = vmax.f32 %v1539, 0.0
    %v1624 = vmax.f32 %v1542, 0.0
    %v1625 = vmax.f32 %v1547, 0.0
    %v1626 = vmax.f32 %v1550, 0.0
    %v1627 = vmax.f32 %v1555, 0.0
    %v1628 = vmax.f32 %v1558, 0.0
    %v1629 = vmax.f32 %v1563, 0.0
    %v1630 = vmax.f32 %v1566, 0.0
    %v1631 = vmax.f32 %v1571, 0.0
    %v1632 = vmax.f32 %v1574, 0.0
    %v1633 = vmax.f32 %v1579, 0.0
    %v1634 = vmax.f32 %v1582, 0.0
    %v1635 = vmax.f32 %v1587, 0.0
    %v1636 = vmax.f32 %v1590, 0.0
    %v1637 = vmax.f32 %v1595, 0.0
    %v1638 = vmax.f32 %v1598, 0.0
    %v1639 = vmax.f32 %v1603, 0.0
    %v1640 = vmax.f32 %v1606, 0.0
    %v1641 = vpack.c.bf16 %v1610, %v1609
    %v1642 = vpack.c.bf16 %v1612, %v1611
    %v1643 = vpack.c.bf16 %v1614, %v1613
    %v1644 = vpack.c.bf16 %v1616, %v1615
    %v1645 = vpack.c.bf16 %v1618, %v1617
    %v1646 = vpack.c.bf16 %v1620, %v1619
    %v1647 = vpack.c.bf16 %v1622, %v1621
    %v1648 = vpack.c.bf16 %v1624, %v1623
    %v1649 = vpack.c.bf16 %v1626, %v1625
    %v1650 = vpack.c.bf16 %v1628, %v1627
    %v1651 = vpack.c.bf16 %v1630, %v1629
    %v1652 = vpack.c.bf16 %v1632, %v1631
    %v1653 = vpack.c.bf16 %v1634, %v1633
    %v1654 = vpack.c.bf16 %v1636, %v1635
    %v1655 = vpack.c.bf16 %v1638, %v1637
    %v1656 = vpack.c.bf16 %v1640, %v1639
    %v1657 = vld [vmem:[#allocation6] sm:$0xf]
    %v1658 = vld [vmem:[#allocation6 + $0x4] sm:$0xf]
    %v1659 = vld [vmem:[#allocation6 + $0x8] sm:$0xf]
    %v1660 = vld [vmem:[#allocation6 + $0xc] sm:$0xf]
    %v1661 = vld [vmem:[#allocation6 + $0x10] sm:$0xf]
    %v1662 = vld [vmem:[#allocation6 + $0x14] sm:$0xf]
    %v1663 = vld [vmem:[#allocation6 + $0x18] sm:$0xf]
    %v1664 = vld [vmem:[#allocation6 + $0x1c] sm:$0xf]
    %v1665 = vld [vmem:[#allocation6 + $0x20] sm:$0xf]
    %v1666 = vld [vmem:[#allocation6 + $0x24] sm:$0xf]
    %v1667 = vld [vmem:[#allocation6 + $0x28] sm:$0xf]
    %v1668 = vld [vmem:[#allocation6 + $0x2c] sm:$0xf]
    %v1669 = vld [vmem:[#allocation6 + $0x30] sm:$0xf]
    %v1670 = vld [vmem:[#allocation6 + $0x34] sm:$0xf]
    %v1671 = vld [vmem:[#allocation6 + $0x38] sm:$0xf]
    %v1672 = vld [vmem:[#allocation6 + $0x3c] sm:$0xf]
    %v1673 = vld [vmem:[%s4] sm:$0x1]
    %v1675 = vlaneseq
    %v1676 = vshrl.u32 %v1675, 7
    %v1677 = vsub.s32 0, %v1676
    %v1678 = vrot.slane %v1673, %v1677
    %v1696 = vunpack.c.l.b16 %v1657
    %v1697 = vunpack.c.l.b16 %v1658
    %v1698 = vunpack.c.l.b16 %v1659
    %v1699 = vunpack.c.l.b16 %v1660
    %v1700 = vunpack.c.l.b16 %v1661
    %v1701 = vunpack.c.l.b16 %v1662
    %v1702 = vunpack.c.l.b16 %v1663
    %v1703 = vunpack.c.l.b16 %v1664
    %v1704 = vunpack.c.l.b16 %v1665
    %v1705 = vunpack.c.l.b16 %v1666
    %v1706 = vunpack.c.l.b16 %v1667
    %v1707 = vunpack.c.l.b16 %v1668
    %v1708 = vunpack.c.l.b16 %v1669
    %v1709 = vunpack.c.l.b16 %v1670
    %v1710 = vunpack.c.l.b16 %v1671
    %v1711 = vunpack.c.l.b16 %v1672
    %v1712 = vpack.c.b16 %v1697, %v1696
    %v1713 = vpack.c.b16 %v1699, %v1698
    %v1714 = vpack.c.b16 %v1701, %v1700
    %v1715 = vpack.c.b16 %v1703, %v1702
    %v1716 = vpack.c.b16 %v1705, %v1704
    %v1717 = vpack.c.b16 %v1707, %v1706
    %v1718 = vpack.c.b16 %v1709, %v1708
    %v1719 = vpack.c.b16 %v1711, %v1710
    %1728 = vmatprep.subr.bf16.mxu0 0
    %1729 = vmatpush1.bf16.msra.mxu0 %v1719
    %1730 = vmatprep.subr.bf16.mxu0 0
    %1731 = vmatpush1.bf16.msra.mxu0 %v1718
    %1732 = vmatprep.subr.bf16.mxu0 0
    %1733 = vmatpush1.bf16.msra.mxu0 %v1717
    %1734 = vmatprep.subr.bf16.mxu0 0
    %1735 = vmatpush1.bf16.msra.mxu0 %v1716
    %1736 = vmatprep.subr.bf16.mxu0 0
    %1737 = vmatpush1.bf16.msra.mxu0 %v1715
    %1738 = vmatprep.subr.bf16.mxu0 0
    %1739 = vmatpush1.bf16.msra.mxu0 %v1714
    %1740 = vmatprep.subr.bf16.mxu0 0
    %1741 = vmatpush1.bf16.msra.mxu0 %v1713
    %1742 = vmatprep.subr.bf16.mxu0 0
    %1743 = vmatpush1.bf16.msra.mxu0 %v1712
    %1744 = vmatprep.subr.bf16.mxu0 0
    %1745 = vmatpush2.bf16.msra.mxu0 0
    %1746 = vmatprep.subr.bf16.mxu0 0
    %1747 = vmatpush2.bf16.msra.mxu0 0
    %1748 = vmatprep.subr.bf16.mxu0 0
    %1749 = vmatpush2.bf16.msra.mxu0 0
    %1750 = vmatprep.subr.bf16.mxu0 0
    %1751 = vmatpush2.bf16.msra.mxu0 0
    %1752 = vmatprep.subr.bf16.mxu0 0
    %1753 = vmatpush2.bf16.msra.mxu0 0
    %1754 = vmatprep.subr.bf16.mxu0 0
    %1755 = vmatpush2.bf16.msra.mxu0 0
    %1756 = vmatprep.subr.bf16.mxu0 0
    %1757 = vmatpush2.bf16.msra.mxu0 0
    %1758 = vmatprep.subr.bf16.mxu0 0
    %1759 = vmatpush2.bf16.msra.mxu0 0
    %1760 = vmatprep.mubr.bf16.mxu0 0
    %1761 = vmatmul.mubr.bf16.gmra.mxu0 %v1641
    %v1762 = vpop.f32.mrf.mxu0
    %v1763 = vadd.f32 %v1678, %v1762
    %v1764 = vpop.f32.mrf.mxu0
    %v1765 = vpop.f32.mrf.mxu0
    %v1766 = vadd.f32 %v1678, %v1765
    %v1767 = vpop.f32.mrf.mxu0
    %1768 = vmatprep.mubr.bf16.mxu0 0
    %1769 = vmatmul.mubr.bf16.gmra.mxu0 %v1642
    %v1770 = vpop.f32.mrf.mxu0
    %v1771 = vadd.f32 %v1678, %v1770
    %v1772 = vpop.f32.mrf.mxu0
    %v1773 = vpop.f32.mrf.mxu0
    %v1774 = vadd.f32 %v1678, %v1773
    %v1775 = vpop.f32.mrf.mxu0
    %1776 = vmatprep.mubr.bf16.mxu0 0
    %1777 = vmatmul.mubr.bf16.gmra.mxu0 %v1643
    %v1778 = vpop.f32.mrf.mxu0
    %v1779 = vadd.f32 %v1678, %v1778
    %v1780 = vpop.f32.mrf.mxu0
    %v1781 = vpop.f32.mrf.mxu0
    %v1782 = vadd.f32 %v1678, %v1781
    %v1783 = vpop.f32.mrf.mxu0
    %1784 = vmatprep.mubr.bf16.mxu0 0
    %1785 = vmatmul.mubr.bf16.gmra.mxu0 %v1644
    %v1786 = vpop.f32.mrf.mxu0
    %v1787 = vadd.f32 %v1678, %v1786
    %v1788 = vpop.f32.mrf.mxu0
    %v1789 = vpop.f32.mrf.mxu0
    %v1790 = vadd.f32 %v1678, %v1789
    %v1791 = vpop.f32.mrf.mxu0
    %1792 = vmatprep.mubr.bf16.mxu0 0
    %1793 = vmatmul.mubr.bf16.gmra.mxu0 %v1645
    %v1794 = vpop.f32.mrf.mxu0
    %v1795 = vadd.f32 %v1678, %v1794
    %v1796 = vpop.f32.mrf.mxu0
    %v1797 = vpop.f32.mrf.mxu0
    %v1798 = vadd.f32 %v1678, %v1797
    %v1799 = vpop.f32.mrf.mxu0
    %1800 = vmatprep.mubr.bf16.mxu0 0
    %1801 = vmatmul.mubr.bf16.gmra.mxu0 %v1646
    %v1802 = vpop.f32.mrf.mxu0
    %v1803 = vadd.f32 %v1678, %v1802
    %v1804 = vpop.f32.mrf.mxu0
    %v1805 = vpop.f32.mrf.mxu0
    %v1806 = vadd.f32 %v1678, %v1805
    %v1807 = vpop.f32.mrf.mxu0
    %1808 = vmatprep.mubr.bf16.mxu0 0
    %1809 = vmatmul.mubr.bf16.gmra.mxu0 %v1647
    %v1810 = vpop.f32.mrf.mxu0
    %v1811 = vadd.f32 %v1678, %v1810
    %v1812 = vpop.f32.mrf.mxu0
    %v1813 = vpop.f32.mrf.mxu0
    %v1814 = vadd.f32 %v1678, %v1813
    %v1815 = vpop.f32.mrf.mxu0
    %1816 = vmatprep.mubr.bf16.mxu0 0
    %1817 = vmatmul.mubr.bf16.gmra.mxu0 %v1648
    %v1818 = vpop.f32.mrf.mxu0
    %v1819 = vadd.f32 %v1678, %v1818
    %v1820 = vpop.f32.mrf.mxu0
    %v1821 = vpop.f32.mrf.mxu0
    %v1822 = vadd.f32 %v1678, %v1821
    %v1823 = vpop.f32.mrf.mxu0
    %1824 = vmatprep.mubr.bf16.mxu0 0
    %1825 = vmatmul.mubr.bf16.gmra.mxu0 %v1649
    %v1826 = vpop.f32.mrf.mxu0
    %v1827 = vadd.f32 %v1678, %v1826
    %v1828 = vpop.f32.mrf.mxu0
    %v1829 = vpop.f32.mrf.mxu0
    %v1830 = vadd.f32 %v1678, %v1829
    %v1831 = vpop.f32.mrf.mxu0
    %1832 = vmatprep.mubr.bf16.mxu0 0
    %1833 = vmatmul.mubr.bf16.gmra.mxu0 %v1650
    %v1834 = vpop.f32.mrf.mxu0
    %v1835 = vadd.f32 %v1678, %v1834
    %v1836 = vpop.f32.mrf.mxu0
    %v1837 = vpop.f32.mrf.mxu0
    %v1838 = vadd.f32 %v1678, %v1837
    %v1839 = vpop.f32.mrf.mxu0
    %1840 = vmatprep.mubr.bf16.mxu0 0
    %1841 = vmatmul.mubr.bf16.gmra.mxu0 %v1651
    %v1842 = vpop.f32.mrf.mxu0
    %v1843 = vadd.f32 %v1678, %v1842
    %v1844 = vpop.f32.mrf.mxu0
    %v1845 = vpop.f32.mrf.mxu0
    %v1846 = vadd.f32 %v1678, %v1845
    %v1847 = vpop.f32.mrf.mxu0
    %1848 = vmatprep.mubr.bf16.mxu0 0
    %1849 = vmatmul.mubr.bf16.gmra.mxu0 %v1652
    %v1850 = vpop.f32.mrf.mxu0
    %v1851 = vadd.f32 %v1678, %v1850
    %v1852 = vpop.f32.mrf.mxu0
    %v1853 = vpop.f32.mrf.mxu0
    %v1854 = vadd.f32 %v1678, %v1853
    %v1855 = vpop.f32.mrf.mxu0
    %1856 = vmatprep.mubr.bf16.mxu0 0
    %1857 = vmatmul.mubr.bf16.gmra.mxu0 %v1653
    %v1858 = vpop.f32.mrf.mxu0
    %v1859 = vadd.f32 %v1678, %v1858
    %v1860 = vpop.f32.mrf.mxu0
    %v1861 = vpop.f32.mrf.mxu0
    %v1862 = vadd.f32 %v1678, %v1861
    %v1863 = vpop.f32.mrf.mxu0
    %1864 = vmatprep.mubr.bf16.mxu0 0
    %1865 = vmatmul.mubr.bf16.gmra.mxu0 %v1654
    %v1866 = vpop.f32.mrf.mxu0
    %v1867 = vadd.f32 %v1678, %v1866
    %v1868 = vpop.f32.mrf.mxu0
    %v1869 = vpop.f32.mrf.mxu0
    %v1870 = vadd.f32 %v1678, %v1869
    %v1871 = vpop.f32.mrf.mxu0
    %1872 = vmatprep.mubr.bf16.mxu0 0
    %1873 = vmatmul.mubr.bf16.gmra.mxu0 %v1655
    %v1874 = vpop.f32.mrf.mxu0
    %v1875 = vadd.f32 %v1678, %v1874
    %v1876 = vpop.f32.mrf.mxu0
    %v1877 = vpop.f32.mrf.mxu0
    %v1878 = vadd.f32 %v1678, %v1877
    %v1879 = vpop.f32.mrf.mxu0
    %1880 = vmatprep.mubr.bf16.mxu0 0
    %1881 = vmatmul.mubr.bf16.gmra.mxu0 %v1656
    %v1882 = vpop.f32.mrf.mxu0
    %v1883 = vadd.f32 %v1678, %v1882
    %v1884 = vpop.f32.mrf.mxu0
    %v1885 = vpop.f32.mrf.mxu0
    %v1886 = vadd.f32 %v1678, %v1885
    %v1887 = vpop.f32.mrf.mxu0
    %1888 = vdwg.mxu0
    %v1889 = vpack.c.bf16 %v1766, %v1763
    %v1890 = vpack.c.bf16 %v1774, %v1771
    %v1891 = vpack.c.bf16 %v1782, %v1779
    %v1892 = vpack.c.bf16 %v1790, %v1787
    %v1893 = vpack.c.bf16 %v1798, %v1795
    %v1894 = vpack.c.bf16 %v1806, %v1803
    %v1895 = vpack.c.bf16 %v1814, %v1811
    %v1896 = vpack.c.bf16 %v1822, %v1819
    %v1897 = vpack.c.bf16 %v1830, %v1827
    %v1898 = vpack.c.bf16 %v1838, %v1835
    %v1899 = vpack.c.bf16 %v1846, %v1843
    %v1900 = vpack.c.bf16 %v1854, %v1851
    %v1901 = vpack.c.bf16 %v1862, %v1859
    %v1902 = vpack.c.bf16 %v1870, %v1867
    %v1903 = vpack.c.bf16 %v1878, %v1875
    %v1904 = vpack.c.bf16 %v1886, %v1883
    %v1921 = vunpack.c.l.b16 %v1889
    %v1922 = vunpack.c.h.b16 %v1889
    %v1923 = vunpack.c.l.b16 %v1890
    %v1924 = vunpack.c.h.b16 %v1890
    %v1925 = vunpack.c.l.b16 %v1891
    %v1926 = vunpack.c.h.b16 %v1891
    %v1927 = vunpack.c.l.b16 %v1892
    %v1928 = vunpack.c.h.b16 %v1892
    %v1929 = vunpack.c.l.b16 %v1893
    %v1930 = vunpack.c.h.b16 %v1893
    %v1931 = vunpack.c.l.b16 %v1894
    %v1932 = vunpack.c.h.b16 %v1894
    %v1933 = vunpack.c.l.b16 %v1895
    %v1934 = vunpack.c.h.b16 %v1895
    %v1935 = vunpack.c.l.b16 %v1896
    %v1936 = vunpack.c.h.b16 %v1896
    %v1937 = vunpack.c.l.b16 %v1897
    %v1938 = vunpack.c.h.b16 %v1897
    %v1939 = vunpack.c.l.b16 %v1898
    %v1940 = vunpack.c.h.b16 %v1898
    %v1941 = vunpack.c.l.b16 %v1899
    %v1942 = vunpack.c.h.b16 %v1899
    %v1943 = vunpack.c.l.b16 %v1900
    %v1944 = vunpack.c.h.b16 %v1900
    %v1945 = vunpack.c.l.b16 %v1901
    %v1946 = vunpack.c.h.b16 %v1901
    %v1947 = vunpack.c.l.b16 %v1902
    %v1948 = vunpack.c.h.b16 %v1902
    %v1949 = vunpack.c.l.b16 %v1903
    %v1950 = vunpack.c.h.b16 %v1903
    %v1951 = vunpack.c.l.b16 %v1904
    %v1952 = vunpack.c.h.b16 %v1904
    %v1953 = vpack.c.b16 %v1921, %v1921
    %v1954 = vpack.c.b16 %v1922, %v1922
    %v1955 = vpack.c.b16 %v1923, %v1923
    %v1956 = vpack.c.b16 %v1924, %v1924
    %v1957 = vpack.c.b16 %v1925, %v1925
    %v1958 = vpack.c.b16 %v1926, %v1926
    %v1959 = vpack.c.b16 %v1927, %v1927
    %v1960 = vpack.c.b16 %v1928, %v1928
    %v1961 = vpack.c.b16 %v1929, %v1929
    %v1962 = vpack.c.b16 %v1930, %v1930
    %v1963 = vpack.c.b16 %v1931, %v1931
    %v1964 = vpack.c.b16 %v1932, %v1932
    %v1965 = vpack.c.b16 %v1933, %v1933
    %v1966 = vpack.c.b16 %v1934, %v1934
    %v1967 = vpack.c.b16 %v1935, %v1935
    %v1968 = vpack.c.b16 %v1936, %v1936
    %v1969 = vpack.c.b16 %v1937, %v1937
    %v1970 = vpack.c.b16 %v1938, %v1938
    %v1971 = vpack.c.b16 %v1939, %v1939
    %v1972 = vpack.c.b16 %v1940, %v1940
    %v1973 = vpack.c.b16 %v1941, %v1941
    %v1974 = vpack.c.b16 %v1942, %v1942
    %v1975 = vpack.c.b16 %v1943, %v1943
    %v1976 = vpack.c.b16 %v1944, %v1944
    %v1977 = vpack.c.b16 %v1945, %v1945
    %v1978 = vpack.c.b16 %v1946, %v1946
    %v1979 = vpack.c.b16 %v1947, %v1947
    %v1980 = vpack.c.b16 %v1948, %v1948
    %v1981 = vpack.c.b16 %v1949, %v1949
    %v1982 = vpack.c.b16 %v1950, %v1950
    %v1983 = vpack.c.b16 %v1951, %v1951
    %v1984 = vpack.c.b16 %v1952, %v1952
    %2017 = vst [vmem:[%s5] sm:$0xf] %v1953
    %2018 = vst [vmem:[%s5 + $0x4] sm:$0xf] %v1954
    %2019 = vst [vmem:[%s5 + $0x8] sm:$0xf] %v1955
    %2020 = vst [vmem:[%s5 + $0xc] sm:$0xf] %v1956
    %2021 = vst [vmem:[%s5 + $0x10] sm:$0xf] %v1957
    %2022 = vst [vmem:[%s5 + $0x14] sm:$0xf] %v1958
    %2023 = vst [vmem:[%s5 + $0x18] sm:$0xf] %v1959
    %2024 = vst [vmem:[%s5 + $0x1c] sm:$0xf] %v1960
    %2025 = vst [vmem:[%s5 + $0x20] sm:$0xf] %v1961
    %2026 = vst [vmem:[%s5 + $0x24] sm:$0xf] %v1962
    %2027 = vst [vmem:[%s5 + $0x28] sm:$0xf] %v1963
    %2028 = vst [vmem:[%s5 + $0x2c] sm:$0xf] %v1964
    %2029 = vst [vmem:[%s5 + $0x30] sm:$0xf] %v1965
    %2030 = vst [vmem:[%s5 + $0x34] sm:$0xf] %v1966
    %2031 = vst [vmem:[%s5 + $0x38] sm:$0xf] %v1967
    %2032 = vst [vmem:[%s5 + $0x3c] sm:$0xf] %v1968
    %2033 = vst [vmem:[%s5 + $0x40] sm:$0xf] %v1969
    %2034 = vst [vmem:[%s5 + $0x44] sm:$0xf] %v1970
    %2035 = vst [vmem:[%s5 + $0x48] sm:$0xf] %v1971
    %2036 = vst [vmem:[%s5 + $0x4c] sm:$0xf] %v1972
    %2037 = vst [vmem:[%s5 + $0x50] sm:$0xf] %v1973
    %2038 = vst [vmem:[%s5 + $0x54] sm:$0xf] %v1974
    %2039 = vst [vmem:[%s5 + $0x58] sm:$0xf] %v1975
    %2040 = vst [vmem:[%s5 + $0x5c] sm:$0xf] %v1976
    %2041 = vst [vmem:[%s5 + $0x60] sm:$0xf] %v1977
    %2042 = vst [vmem:[%s5 + $0x64] sm:$0xf] %v1978
    %2043 = vst [vmem:[%s5 + $0x68] sm:$0xf] %v1979
    %2044 = vst [vmem:[%s5 + $0x6c] sm:$0xf] %v1980
    %2045 = vst [vmem:[%s5 + $0x70] sm:$0xf] %v1981
    %2046 = vst [vmem:[%s5 + $0x74] sm:$0xf] %v1982
    %2047 = vst [vmem:[%s5 + $0x78] sm:$0xf] %v1983
    %2048 = vst [vmem:[%s5 + $0x7c] sm:$0xf] %v1984
    // Predicated region
    $region34: #{mlp_forward.1} parent=1 // pred_check
      _
    $region35: #{mlp_forward.1} parent=1 // pred_check_branch
      %2050 = sbr.rel (0) target = $region37
    $region36: #{mlp_forward.1} parent=1 // pred_region
      _
    $region37: #{mlp_forward.1} parent=1 // pred_fallthru
      _
    // Predicated region
    $region38: #{mlp_forward.1} parent=1 // pred_check
      _
    $region39: #{mlp_forward.1} parent=1 // pred_check_branch
      %2052 = sbr.rel (0) target = $region41
    $region40: #{mlp_forward.1} parent=1 // pred_region
      _
    $region41: #{mlp_forward.1} parent=1 // pred_fallthru
      _
    %2053 = vsyncpa [#allocation3], 1
    %2054 = vsyncpa [#allocation5], 1

</llo_original>
